<compile_context>
chip_gen: v7x
topology: tpu7x:2x2x1
jax: 0.10.0
libtpu: 0.0.40
codegen_flags: <defaults>
</compile_context>

<pallas_src>
import functools

import jax
import jax.numpy as jnp
from jax.experimental import pallas as pl
from jax.experimental.pallas import tpu as pltpu

# Globals implied by the PyTorch module (chosen deterministically here).
GNN_edge_num_layers = 3            # -> 2 GraphConv layers
GNN_edge_decoder_type = "linear"   # decoder branch implemented below
NUM_COL = 48                       # -> edge-score dim = int(48 * 2 / 3) = 32

LANE = 128                         # lane-dense feature padding
EDGE_TILE = 8                      # edges per decoder grid step
MATMUL_DTYPE = jnp.bfloat16        # Ahat / HW operands (f32 accumulate on MXU)
VMEM_LIMIT = 32 * 1024 * 1024      # explicit scoped-VMEM budget (fits v5e/v6e/v7x)


def _round_up(x, m):
    return ((x + m - 1) // m) * m


def _pad2(x, rows, cols):
    r, c = x.shape
    return jnp.pad(x, ((0, rows - r), (0, cols - c)))


def _pick_tile(n_pad, candidates=(512, 256, 128)):
    for t in candidates:
        if n_pad % t == 0:
            return t
    return n_pad


# ---------------------------------------------------------------------------
# Kernel 1: HW = H @ W   (hoisted out of the aggregation kernel, row-tiled)
# ---------------------------------------------------------------------------
def _hw_kernel(h_ref, w_ref, o_ref):
    o_ref[...] = jnp.dot(h_ref[...], w_ref[...],
                         preferred_element_type=jnp.float32).astype(o_ref.dtype)


def hw_matmul(h, w, row_tile):
    n_pad, d = h.shape
    return pl.pallas_call(
        _hw_kernel,
        out_shape=jax.ShapeDtypeStruct((n_pad, d), MATMUL_DTYPE),
        grid_spec=pltpu.PrefetchScalarGridSpec(
            num_scalar_prefetch=0,
            grid=(n_pad // row_tile,),
            in_specs=[pl.BlockSpec((row_tile, d), lambda i: (i, 0)),
                      pl.BlockSpec((d, d), lambda i: (0, 0))],   # W resident
            out_specs=pl.BlockSpec((row_tile, d), lambda i: (i, 0)),
        ),
        compiler_params=pltpu.CompilerParams(
            dimension_semantics=("parallel",),
            vmem_limit_bytes=VMEM_LIMIT),
    )(h, w)


# ---------------------------------------------------------------------------
# Kernel 2 (fused): M = Ahat @ HW + b  AND  BatchNorm batch statistics.
#   Tiled K-reduction with an f32 VMEM accumulator; at the last k step the
#   finished row tile is written out and its masked column sums / sums of
#   squares are accumulated into resident (1, D) outputs; at the last grid
#   step the stats are finalized to (mean, rsqrt(var + eps)).
#   Row axis must be "arbitrary": mean/rstd are shared accumulators.
# ---------------------------------------------------------------------------
def _agg_stats_kernel(a_ref, hw_ref, b_ref, m_ref, mean_ref, rstd_ref, acc_ref,
                      *, n_real, eps):
    i = pl.program_id(0)
    k = pl.program_id(1)
    last_k = k == pl.num_programs(1) - 1
    last_i = i == pl.num_programs(0) - 1

    @pl.when(jnp.logical_and(i == 0, k == 0))
    def _():
        mean_ref[...] = jnp.zeros_like(mean_ref)
        rstd_ref[...] = jnp.zeros_like(rstd_ref)

    @pl.when(k == 0)
    def _():
        acc_ref[...] = jnp.zeros_like(acc_ref)

    acc_ref[...] += jnp.dot(a_ref[...], hw_ref[...],
                            preferred_element_type=jnp.float32)

    @pl.when(last_k)
    def _():
        m = acc_ref[...] + b_ref[...]
        m_ref[...] = m
        # mask out padded node rows so stats match BatchNorm1d over real nodes
        rows = jax.lax.broadcasted_iota(jnp.int32, m.shape, 0) + i * m.shape[0]
        x = jnp.where(rows < n_real, m, 0.0)
        mean_ref[...] += jnp.sum(x, axis=0, keepdims=True)        # running sum
        rstd_ref[...] += jnp.sum(x * x, axis=0, keepdims=True)    # running sum sq

    @pl.when(jnp.logical_and(last_k, last_i))
    def _():
        inv_n = 1.0 / float(n_real)
        mu = mean_ref[...] * inv_n
        var = jnp.maximum(rstd_ref[...] * inv_n - mu * mu, 0.0)
        mean_ref[...] = mu
        rstd_ref[...] = jax.lax.rsqrt(var + eps)


def aggregate_stats(ahat, hw, b, n_real, row_tile, eps=1e-5):
    n_pad = ahat.shape[0]
    d = hw.shape[1]
    tk = _pick_tile(n_pad)
    kern = functools.partial(_agg_stats_kernel, n_real=n_real, eps=eps)
    return pl.pallas_call(
        kern,
        out_shape=(jax.ShapeDtypeStruct((n_pad, d), jnp.float32),
                   jax.ShapeDtypeStruct((1, d), jnp.float32),
                   jax.ShapeDtypeStruct((1, d), jnp.float32)),
        grid_spec=pltpu.PrefetchScalarGridSpec(
            num_scalar_prefetch=0,
            grid=(n_pad // row_tile, n_pad // tk),
            in_specs=[pl.BlockSpec((row_tile, tk), lambda i, k: (i, k)),
                      pl.BlockSpec((tk, d), lambda i, k: (k, 0)),
                      pl.BlockSpec((1, d), lambda i, k: (0, 0))],  # bias resident
            out_specs=(pl.BlockSpec((row_tile, d), lambda i, k: (i, 0)),
                       pl.BlockSpec((1, d), lambda i, k: (0, 0)),   # mean resident
                       pl.BlockSpec((1, d), lambda i, k: (0, 0))),  # rstd resident
            scratch_shapes=[pltpu.VMEM((row_tile, d), jnp.float32)],
        ),
        compiler_params=pltpu.CompilerParams(
            # row axis is a shared-stats reduction -> arbitrary (sequential)
            dimension_semantics=("arbitrary", "arbitrary"),
            vmem_limit_bytes=VMEM_LIMIT),
    )(ahat, hw, b)


# ---------------------------------------------------------------------------
# Kernel 3: BN apply + ReLU + fused skip-connection running sum (row-tiled).
#   The skip accumulator is updated in place via input_output_aliases.
# ---------------------------------------------------------------------------
def _bn_relu_skip_kernel(m_ref, mean_ref, rstd_ref, gamma_ref, beta_ref,
                         skip_ref, h_ref, skip_out_ref):
    xhat = (m_ref[...] - mean_ref[...]) * rstd_ref[...]
    h = jnp.maximum(xhat * gamma_ref[...] + beta_ref[...], 0.0)   # BN affine + ReLU
    h_ref[...] = h
    skip_out_ref[...] = skip_ref[...] + h        # fused sum(hidden_rep) accumulation


def bn_relu_skip(m, mean, rstd, gamma, beta, skip, row_tile):
    n_pad, d = m.shape
    row_spec = pl.BlockSpec((row_tile, d), lambda i: (i, 0))
    vec_spec = pl.BlockSpec((1, d), lambda i: (0, 0))
    return pl.pallas_call(
        _bn_relu_skip_kernel,
        out_shape=(jax.ShapeDtypeStruct((n_pad, d), jnp.float32),
                   jax.ShapeDtypeStruct((n_pad, d), jnp.float32)),
        grid_spec=pltpu.PrefetchScalarGridSpec(
            num_scalar_prefetch=0,
            grid=(n_pad // row_tile,),
            in_specs=[row_spec, vec_spec, vec_spec, vec_spec, vec_spec, row_spec],
            out_specs=(row_spec, row_spec),
        ),
        input_output_aliases={5: 1},   # skip (input 5) updated in place -> output 1
        compiler_params=pltpu.CompilerParams(
            dimension_semantics=("parallel",),
            vmem_limit_bytes=VMEM_LIMIT),
    )(m, mean, rstd, gamma, beta, skip)


# ---------------------------------------------------------------------------
# Kernel 4: 'linear' edge decoder, endpoint gather fused in-kernel.
#   score = h[u] @ W[:D] + h[v] @ W[D:] + b   (== cat([h_u, h_v]) @ W + b)
#   h is VMEM-resident (constant index_map -> DMA'd once); endpoint rows are
#   gathered with dynamic sublane slices indexed by scalar-prefetched u/v.
# ---------------------------------------------------------------------------
def _decoder_kernel(u_ref, v_ref,               # scalar-prefetched edge indices (SMEM)
                    h_ref,                      # node features, resident in VMEM
                    wu_ref, wv_ref, b_ref,      # resident weights / bias (VMEM)
                    o_ref,                      # (EDGE_TILE, DO)
                    hu_buf, hv_buf):            # VMEM gather staging buffers
    e0 = pl.program_id(0) * EDGE_TILE
    for i in range(EDGE_TILE):                  # dynamic row gather from VMEM
        hu_buf[pl.ds(i, 1), :] = h_ref[pl.ds(u_ref[e0 + i], 1), :]
        hv_buf[pl.ds(i, 1), :] = h_ref[pl.ds(v_ref[e0 + i], 1), :]
    o_ref[...] = (jnp.dot(hu_buf[...], wu_ref[...],
                          preferred_element_type=jnp.float32)
                  + jnp.dot(hv_buf[...], wv_ref[...],
                            preferred_element_type=jnp.float32)
                  + b_ref[...])


def edge_decoder(h, u, v, wu, wv, b):
    # TODO(synk): h is held fully resident in VMEM; for very large graphs fall
    # back to an HBM-resident h with manual per-row DMA gathers.
    e_pad = u.shape[0]
    n_pad, d = h.shape
    do = wu.shape[1]
    return pl.pallas_call(
        _decoder_kernel,
        out_shape=jax.ShapeDtypeStruct((e_pad, do), jnp.float32),
        grid_spec=pltpu.PrefetchScalarGridSpec(
            num_scalar_prefetch=2,
            grid=(e_pad // EDGE_TILE,),
            in_specs=[pl.BlockSpec((n_pad, d), lambda e, u, v: (0, 0)),   # h resident
                      pl.BlockSpec((d, do), lambda e, u, v: (0, 0)),
                      pl.BlockSpec((d, do), lambda e, u, v: (0, 0)),
                      pl.BlockSpec((1, do), lambda e, u, v: (0, 0))],
            out_specs=pl.BlockSpec((EDGE_TILE, do), lambda e, u, v: (e, 0)),
            scratch_shapes=[pltpu.VMEM((EDGE_TILE, d), jnp.float32),
                            pltpu.VMEM((EDGE_TILE, d), jnp.float32)],
        ),
        compiler_params=pltpu.CompilerParams(
            dimension_semantics=("arbitrary",),
            vmem_limit_bytes=VMEM_LIMIT),
    )(u, v, h, wu, wv, b)


# ---------------------------------------------------------------------------
# Parameters / graph setup (host-side glue)
# ---------------------------------------------------------------------------
def init_params(key, numberofglycos, hidden_dim, out_dim, num_layers):
    feat_pad = _round_up(hidden_dim, LANE)
    out_pad = _round_up(out_dim, LANE)
    ks = jax.random.split(key, 2 + num_layers)
    emb = jax.random.normal(ks[0], (numberofglycos, hidden_dim), jnp.float32)
    params = {
        "embedding": _pad2(emb, numberofglycos, feat_pad),
        "layers": [],
    }
    for i in range(num_layers):
        w = jax.random.normal(ks[1 + i], (hidden_dim, hidden_dim), jnp.float32) * 0.1
        params["layers"].append((
            _pad2(w, feat_pad, feat_pad),                                  # GraphConv W
            jnp.zeros((1, feat_pad), jnp.float32),                         # GraphConv b
            _pad2(jnp.ones((1, hidden_dim), jnp.float32), 1, feat_pad),    # BN gamma
            jnp.zeros((1, feat_pad), jnp.float32),                         # BN beta
        ))
    # nn.Linear(2*hidden, out_dim): split the concat weight once on the host.
    w_full = jax.random.normal(ks[-1], (2 * hidden_dim, out_dim), jnp.float32) * 0.1
    params["Wu"] = _pad2(w_full[:hidden_dim], feat_pad, out_pad)
    params["Wv"] = _pad2(w_full[hidden_dim:], feat_pad, out_pad)
    params["W_b"] = jnp.zeros((1, out_pad), jnp.float32)
    return params


def build_norm_adj(u, v, n_nodes, n_pad):
    # Mirrors: g.add_edges(v, u); g = g.add_self_loop();  A[dst, src] = 1
    # TODO(synk): dense O(N^2) adjacency (binary, so duplicate multigraph edges
    # collapse); a CSR SpMM with scalar-prefetched row pointers would be needed
    # for large sparse graphs.
    a = jnp.zeros((n_pad, n_pad), jnp.float32)
    a = a.at[v, u].set(1.0)                      # original edges u -> v
    a = a.at[u, v].set(1.0)                      # added reverse edges v -> u
    diag = jnp.arange(n_nodes)
    a = a.at[diag, diag].set(1.0)                # self loops on real nodes
    deg = jnp.sum(a, axis=1)
    dinv = jnp.where(deg > 0, jax.lax.rsqrt(deg), 0.0)
    return a * dinv[:, None] * dinv[None, :]     # D^-1/2 A D^-1/2


@functools.partial(jax.jit, static_argnames=("n_nodes", "out_dim"))
def gcn_forward(params, u, v, node_ids, *, n_nodes, out_dim):
    # TODO(synk): peptide_rep / peptide_ind override branch not exercised
    # (forward is called with peptide_rep=None); SumPooling is unused.
    n_pad = _round_up(n_nodes, LANE)
    row_tile = _pick_tile(n_pad, candidates=(256, 128))
    ahat = build_norm_adj(u, v, n_nodes, n_pad).astype(MATMUL_DTYPE)

    h = params["embedding"][node_ids]                 # embedding lookup (glue gather)
    h = jnp.pad(h, ((0, n_pad - n_nodes), (0, 0)))    # pad node rows (zeros)
    skip = h                                          # running skip-connection sum
    for (w, b, gamma, beta) in params["layers"]:
        hw = hw_matmul(h, w, row_tile)                # H @ W (once per layer)
        m, mean, rstd = aggregate_stats(              # Ahat @ HW + b  +  BN stats
            ahat, hw, b, n_nodes, row_tile)
        h, skip = bn_relu_skip(m, mean, rstd, gamma, beta, skip, row_tile)

    # GNN_edge_decoder_type == 'linear'  (gather + decode fused in one kernel)
    n_edges = u.shape[0]
    e_pad = _round_up(n_edges, EDGE_TILE)
    u_pad = jnp.pad(u.astype(jnp.int32), (0, e_pad - n_edges))
    v_pad = jnp.pad(v.astype(jnp.int32), (0, e_pad - n_edges))
    score = edge_decoder(skip, u_pad, v_pad, params["Wu"], params["Wv"], params["W_b"])
    return score[:n_edges, :out_dim]                  # strip padding (glue slice)


if __name__ == "__main__":
    key = jax.random.PRNGKey(0)
    numberofglycos = 10
    hidden_dim = 32
    out_dim = int(NUM_COL * 2 / 3)        # 32
    n_nodes = 16
    num_layers = GNN_edge_num_layers - 1  # 2

    k_params, k_nodes = jax.random.split(key)
    params = init_params(k_params, numberofglycos, hidden_dim, out_dim, num_layers)

    node_ids = jax.random.randint(k_nodes, (n_nodes,), 0, numberofglycos)
    # deterministic small graph: a directed ring (16 original edges)
    u = jnp.arange(n_nodes, dtype=jnp.int32)
    v = (u + 1) % n_nodes

    score = gcn_forward(params, u, v, node_ids, n_nodes=n_nodes, out_dim=out_dim)
    jax.block_until_ready(score)
    assert score.shape == (n_nodes, out_dim)
    assert jnp.isfinite(score).all()
    print("KERNEL_OK")
</pallas_src>

<mosaic_0001>
module attributes {stable_mosaic.version = 11 : i64} {
  func.func @_hw_kernel(%arg0: i32, %arg1: memref<128x128xf32, #tpu.memory_space<vmem>>, %arg2: memref<128x128xf32, #tpu.memory_space<vmem>>, %arg3: memref<128x128xbf16, #tpu.memory_space<vmem>>) attributes {dimension_semantics = [#tpu.dimension_semantics<parallel>], iteration_bounds = array<i64: 1>, scalar_prefetch = 0 : i64, scratch_operands = 0 : i64, tpu.core_type = #tpu.core_type<tc>, window_params = [{transform_indices = @transform_0, window_bounds = array<i64: 128, 128>}, {pipeline_mode = #tpu.pipeline_mode<synchronous>, transform_indices = @transform_1, window_bounds = array<i64: 128, 128>}, {transform_indices = @transform_2, window_bounds = array<i64: 128, 128>}]} {
    %c0 = arith.constant 0 : index
    %c0_0 = arith.constant 0 : index
    %0 = vector.load %arg1[%c0, %c0_0] : memref<128x128xf32, #tpu.memory_space<vmem>>, vector<128x128xf32>
    %c0_1 = arith.constant 0 : index
    %c0_2 = arith.constant 0 : index
    %1 = vector.load %arg2[%c0_1, %c0_2] : memref<128x128xf32, #tpu.memory_space<vmem>>, vector<128x128xf32>
    %cst = arith.constant dense<0.000000e+00> : vector<128x128xf32>
    %2 = tpu.matmul %0, %1, %cst {dimension_numbers = #tpu.dot_dimension_numbers<[1], [0], [0], [1], [0, 0, 1, 1], [], []>} : vector<128x128xf32>, vector<128x128xf32>, vector<128x128xf32> -> vector<128x128xf32>
    %3 = arith.truncf %2 : vector<128x128xf32> to vector<128x128xbf16>
    %c0_3 = arith.constant 0 : index
    %c0_4 = arith.constant 0 : index
    %4 = vector.load %arg3[%c0_3, %c0_4] : memref<128x128xbf16, #tpu.memory_space<vmem>>, vector<128x128xbf16>
    tpu.vector_store %arg3[%c0_3, %c0_4], %3 {strides = array<i32>} : memref<128x128xbf16, #tpu.memory_space<vmem>>, vector<128x128xbf16>,
    return
  }
  func.func @transform_0(%arg0: i32) -> (i32, i32) {
    %c0_i32 = arith.constant 0 : i32
    %c0_i32_0 = arith.constant 0 : i32
    return %arg0, %c0_i32 : i32, i32
  }
  func.func @transform_1(%arg0: i32) -> (i32, i32) {
    %c0_i32 = arith.constant 0 : i32
    %c0_i32_0 = arith.constant 0 : i32
    %c0_i32_1 = arith.constant 0 : i32
    return %c0_i32, %c0_i32_0 : i32, i32
  }
  func.func @transform_2(%arg0: i32) -> (i32, i32) {
    %c0_i32 = arith.constant 0 : i32
    %c0_i32_0 = arith.constant 0 : i32
    return %arg0, %c0_i32 : i32, i32
  }
}

module attributes {stable_mosaic.version = 11 : i64} {
  func.func @_agg_stats_kernel(%arg0: i32, %arg1: i32, %arg2: memref<128x128xbf16, #tpu.memory_space<vmem>>, %arg3: memref<128x128xbf16, #tpu.memory_space<vmem>>, %arg4: memref<1x128xf32, #tpu.memory_space<vmem>>, %arg5: memref<128x128xf32, #tpu.memory_space<vmem>>, %arg6: memref<1x128xf32, #tpu.memory_space<vmem>>, %arg7: memref<1x128xf32, #tpu.memory_space<vmem>>, %arg8: memref<128x128xf32, #tpu.memory_space<vmem>>) attributes {dimension_semantics = [#tpu.dimension_semantics<arbitrary>, #tpu.dimension_semantics<arbitrary>], iteration_bounds = array<i64: 1, 1>, scalar_prefetch = 0 : i64, scratch_operands = 1 : i64, tpu.core_type = #tpu.core_type<tc>, window_params = [{transform_indices = @transform_0, window_bounds = array<i64: 128, 128>}, {transform_indices = @transform_1, window_bounds = array<i64: 128, 128>}, {pipeline_mode = #tpu.pipeline_mode<synchronous>, transform_indices = @transform_2, window_bounds = array<i64: 1, 128>}, {transform_indices = @transform_3, window_bounds = array<i64: 128, 128>}, {pipeline_mode = #tpu.pipeline_mode<synchronous>, transform_indices = @transform_4, window_bounds = array<i64: 1, 128>}, {pipeline_mode = #tpu.pipeline_mode<synchronous>, transform_indices = @transform_5, window_bounds = array<i64: 1, 128>}]} {
    %c0_i32 = arith.constant 0 : i32
    %0 = arith.cmpi eq, %arg1, %c0_i32 : i32
    %c0_i32_0 = arith.constant 0 : i32
    %1 = arith.cmpi eq, %arg0, %c0_i32_0 : i32
    %c0_i32_1 = arith.constant 0 : i32
    %2 = arith.cmpi eq, %arg0, %c0_i32_1 : i32
    %c0_i32_2 = arith.constant 0 : i32
    %3 = arith.cmpi eq, %arg1, %c0_i32_2 : i32
    %4 = arith.andi %2, %3 : i1
    %5 = arith.extui %4 : i1 to i32
    %c0_i32_3 = arith.constant 0 : i32
    %6 = arith.cmpi ne, %5, %c0_i32_3 : i32
    scf.if %6 {
      %cst_15 = arith.constant 0.000000e+00 : f32
      %21 = vector.broadcast %cst_15 : f32 to vector<1x128xf32>
      %c0_16 = arith.constant 0 : index
      %c0_17 = arith.constant 0 : index
      %22 = vector.load %arg6[%c0_16, %c0_17] : memref<1x128xf32, #tpu.memory_space<vmem>>, vector<1x128xf32>
      tpu.vector_store %arg6[%c0_16, %c0_17], %21 {strides = array<i32>} : memref<1x128xf32, #tpu.memory_space<vmem>>, vector<1x128xf32>,
      %cst_18 = arith.constant 0.000000e+00 : f32
      %23 = vector.broadcast %cst_18 : f32 to vector<1x128xf32>
      %c0_19 = arith.constant 0 : index
      %c0_20 = arith.constant 0 : index
      %24 = vector.load %arg7[%c0_19, %c0_20] : memref<1x128xf32, #tpu.memory_space<vmem>>, vector<1x128xf32>
      tpu.vector_store %arg7[%c0_19, %c0_20], %23 {strides = array<i32>} : memref<1x128xf32, #tpu.memory_space<vmem>>, vector<1x128xf32>,
    } else {
    }
    %c0_i32_4 = arith.constant 0 : i32
    %7 = arith.cmpi eq, %arg1, %c0_i32_4 : i32
    %8 = arith.extui %7 : i1 to i32
    %c0_i32_5 = arith.constant 0 : i32
    %9 = arith.cmpi ne, %8, %c0_i32_5 : i32
    scf.if %9 {
      %cst_15 = arith.constant 0.000000e+00 : f32
      %21 = vector.broadcast %cst_15 : f32 to vector<128x128xf32>
      %c0_16 = arith.constant 0 : index
      %c0_17 = arith.constant 0 : index
      %22 = vector.load %arg8[%c0_16, %c0_17] : memref<128x128xf32, #tpu.memory_space<vmem>>, vector<128x128xf32>
      tpu.vector_store %arg8[%c0_16, %c0_17], %21 {strides = array<i32>} : memref<128x128xf32, #tpu.memory_space<vmem>>, vector<128x128xf32>,
    } else {
    }
    %c0 = arith.constant 0 : index
    %c0_6 = arith.constant 0 : index
    %10 = vector.load %arg8[%c0, %c0_6] : memref<128x128xf32, #tpu.memory_space<vmem>>, vector<128x128xf32>
    %c0_7 = arith.constant 0 : index
    %c0_8 = arith.constant 0 : index
    %11 = vector.load %arg2[%c0_7, %c0_8] : memref<128x128xbf16, #tpu.memory_space<vmem>>, vector<128x128xbf16>
    %c0_9 = arith.constant 0 : index
    %c0_10 = arith.constant 0 : index
    %12 = vector.load %arg3[%c0_9, %c0_10] : memref<128x128xbf16, #tpu.memory_space<vmem>>, vector<128x128xbf16>
    %cst = arith.constant dense<0.000000e+00> : vector<128x128xf32>
    %13 = tpu.matmul %11, %12, %cst {dimension_numbers = #tpu.dot_dimension_numbers<[1], [0], [0], [1], [0, 0, 1, 1], [], []>} : vector<128x128xbf16>, vector<128x128xbf16>, vector<128x128xf32> -> vector<128x128xf32>
    %14 = arith.addf %10, %13 : vector<128x128xf32>
    %c0_11 = arith.constant 0 : index
    %c0_12 = arith.constant 0 : index
    %15 = vector.load %arg8[%c0_11, %c0_12] : memref<128x128xf32, #tpu.memory_space<vmem>>, vector<128x128xf32>
    tpu.vector_store %arg8[%c0_11, %c0_12], %14 {strides = array<i32>} : memref<128x128xf32, #tpu.memory_space<vmem>>, vector<128x128xf32>,
    %16 = arith.extui %0 : i1 to i32
    %c0_i32_13 = arith.constant 0 : i32
    %17 = arith.cmpi ne, %16, %c0_i32_13 : i32
    scf.if %17 {
      %c0_15 = arith.constant 0 : index
      %c0_16 = arith.constant 0 : index
      %21 = vector.load %arg8[%c0_15, %c0_16] : memref<128x128xf32, #tpu.memory_space<vmem>>, vector<128x128xf32>
      %c0_17 = arith.constant 0 : index
      %c0_18 = arith.constant 0 : index
      %22 = vector.load %arg4[%c0_17, %c0_18] : memref<1x128xf32, #tpu.memory_space<vmem>>, vector<1x128xf32>
      %23 = vector.broadcast %22 : vector<1x128xf32> to vector<128x128xf32>
      %24 = arith.addf %21, %23 : vector<128x128xf32>
      %c0_19 = arith.constant 0 : index
      %c0_20 = arith.constant 0 : index
      %25 = vector.load %arg5[%c0_19, %c0_20] : memref<128x128xf32, #tpu.memory_space<vmem>>, vector<128x128xf32>
      tpu.vector_store %arg5[%c0_19, %c0_20], %24 {strides = array<i32>} : memref<128x128xf32, #tpu.memory_space<vmem>>, vector<128x128xf32>,
      %26 = tpu.iota {dimensions = array<i32: 0>} : vector<128x128xi32>
      %c128_i32 = arith.constant 128 : i32
      %27 = arith.muli %arg0, %c128_i32 : i32
      %28 = vector.broadcast %27 : i32 to vector<128x128xi32>
      %29 = arith.addi %26, %28 : vector<128x128xi32>
      %c16_i32 = arith.constant 16 : i32
      %30 = vector.broadcast %c16_i32 : i32 to vector<128x128xi32>
      %31 = arith.cmpi slt, %29, %30 : vector<128x128xi32>
      %cst_21 = arith.constant 0.000000e+00 : f32
      %32 = vector.broadcast %cst_21 : f32 to vector<128x128xf32>
      %33 = arith.select %31, %24, %32 : vector<128x128xi1>, vector<128x128xf32>
      %c0_22 = arith.constant 0 : index
      %c0_23 = arith.constant 0 : index
      %34 = vector.load %arg6[%c0_22, %c0_23] : memref<1x128xf32, #tpu.memory_space<vmem>>, vector<1x128xf32>
      %cst_24 = arith.constant dense<0.000000e+00> : vector<128xf32>
      %35 = vector.multi_reduction <add>, %33, %cst_24 [0] : vector<128x128xf32> to vector<128xf32>
      %36 = vector.shape_cast %35 : vector<128xf32> to vector<1x128xf32>
      %37 = arith.addf %34, %36 : vector<1x128xf32>
      %c0_25 = arith.constant 0 : index
      %c0_26 = arith.constant 0 : index
      %38 = vector.load %arg6[%c0_25, %c0_26] : memref<1x128xf32, #tpu.memory_space<vmem>>, vector<1x128xf32>
      tpu.vector_store %arg6[%c0_25, %c0_26], %37 {strides = array<i32>} : memref<1x128xf32, #tpu.memory_space<vmem>>, vector<1x128xf32>,
      %c0_27 = arith.constant 0 : index
      %c0_28 = arith.constant 0 : index
      %39 = vector.load %arg7[%c0_27, %c0_28] : memref<1x128xf32, #tpu.memory_space<vmem>>, vector<1x128xf32>
      %40 = arith.mulf %33, %33 : vector<128x128xf32>
      %cst_29 = arith.constant dense<0.000000e+00> : vector<128xf32>
      %41 = vector.multi_reduction <add>, %40, %cst_29 [0] : vector<128x128xf32> to vector<128xf32>
      %42 = vector.shape_cast %41 : vector<128xf32> to vector<1x128xf32>
      %43 = arith.addf %39, %42 : vector<1x128xf32>
      %c0_30 = arith.constant 0 : index
      %c0_31 = arith.constant 0 : index
      %44 = vector.load %arg7[%c0_30, %c0_31] : memref<1x128xf32, #tpu.memory_space<vmem>>, vector<1x128xf32>
      tpu.vector_store %arg7[%c0_30, %c0_31], %43 {strides = array<i32>} : memref<1x128xf32, #tpu.memory_space<vmem>>, vector<1x128xf32>,
    } else {
    }
    %18 = arith.andi %0, %1 : i1
    %19 = arith.extui %18 : i1 to i32
    %c0_i32_14 = arith.constant 0 : i32
    %20 = arith.cmpi ne, %19, %c0_i32_14 : i32
    scf.if %20 {
      %c0_15 = arith.constant 0 : index
      %c0_16 = arith.constant 0 : index
      %21 = vector.load %arg6[%c0_15, %c0_16] : memref<1x128xf32, #tpu.memory_space<vmem>>, vector<1x128xf32>
      %cst_17 = arith.constant 6.250000e-02 : f32
      %22 = vector.broadcast %cst_17 : f32 to vector<1x128xf32>
      %23 = arith.mulf %21, %22 : vector<1x128xf32>
      %c0_18 = arith.constant 0 : index
      %c0_19 = arith.constant 0 : index
      %24 = vector.load %arg7[%c0_18, %c0_19] : memref<1x128xf32, #tpu.memory_space<vmem>>, vector<1x128xf32>
      %cst_20 = arith.constant 6.250000e-02 : f32
      %25 = vector.broadcast %cst_20 : f32 to vector<1x128xf32>
      %26 = arith.mulf %24, %25 : vector<1x128xf32>
      %27 = arith.mulf %23, %23 : vector<1x128xf32>
      %28 = arith.subf %26, %27 : vector<1x128xf32>
      %cst_21 = arith.constant 0.000000e+00 : f32
      %29 = vector.broadcast %cst_21 : f32 to vector<1x128xf32>
      %30 = arith.maximumf %28, %29 : vector<1x128xf32>
      %c0_22 = arith.constant 0 : index
      %c0_23 = arith.constant 0 : index
      %31 = vector.load %arg6[%c0_22, %c0_23] : memref<1x128xf32, #tpu.memory_space<vmem>>, vector<1x128xf32>
      tpu.vector_store %arg6[%c0_22, %c0_23], %23 {strides = array<i32>} : memref<1x128xf32, #tpu.memory_space<vmem>>, vector<1x128xf32>,
      %cst_24 = arith.constant 9.99999974E-6 : f32
      %32 = vector.broadcast %cst_24 : f32 to vector<1x128xf32>
      %33 = arith.addf %30, %32 : vector<1x128xf32>
      %34 = math.rsqrt %33 : vector<1x128xf32>
      %c0_25 = arith.constant 0 : index
      %c0_26 = arith.constant 0 : index
      %35 = vector.load %arg7[%c0_25, %c0_26] : memref<1x128xf32, #tpu.memory_space<vmem>>, vector<1x128xf32>
      tpu.vector_store %arg7[%c0_25, %c0_26], %34 {strides = array<i32>} : memref<1x128xf32, #tpu.memory_space<vmem>>, vector<1x128xf32>,
    } else {
    }
    return
  }
  func.func @transform_0(%arg0: i32, %arg1: i32) -> (i32, i32) {
    %c0_i32 = arith.constant 0 : i32
    return %arg0, %arg1 : i32, i32
  }
  func.func @transform_1(%arg0: i32, %arg1: i32) -> (i32, i32) {
    %c0_i32 = arith.constant 0 : i32
    %c0_i32_0 = arith.constant 0 : i32
    return %arg1, %c0_i32 : i32, i32
  }
  func.func @transform_2(%arg0: i32, %arg1: i32) -> (i32, i32) {
    %c0_i32 = arith.constant 0 : i32
    %c0_i32_0 = arith.constant 0 : i32
    %c0_i32_1 = arith.constant 0 : i32
    return %c0_i32, %c0_i32_0 : i32, i32
  }
  func.func @transform_3(%arg0: i32, %arg1: i32) -> (i32, i32) {
    %c0_i32 = arith.constant 0 : i32
    %c0_i32_0 = arith.constant 0 : i32
    return %arg0, %c0_i32 : i32, i32
  }
  func.func @transform_4(%arg0: i32, %arg1: i32) -> (i32, i32) {
    %c0_i32 = arith.constant 0 : i32
    %c0_i32_0 = arith.constant 0 : i32
    %c0_i32_1 = arith.constant 0 : i32
    return %c0_i32, %c0_i32_0 : i32, i32
  }
  func.func @transform_5(%arg0: i32, %arg1: i32) -> (i32, i32) {
    %c0_i32 = arith.constant 0 : i32
    %c0_i32_0 = arith.constant 0 : i32
    %c0_i32_1 = arith.constant 0 : i32
    return %c0_i32, %c0_i32_0 : i32, i32
  }
}

module attributes {stable_mosaic.version = 11 : i64} {
  func.func @_bn_relu_skip_kernel(%arg0: i32, %arg1: memref<128x128xf32, #tpu.memory_space<vmem>>, %arg2: memref<1x128xf32, #tpu.memory_space<vmem>>, %arg3: memref<1x128xf32, #tpu.memory_space<vmem>>, %arg4: memref<1x128xf32, #tpu.memory_space<vmem>>, %arg5: memref<1x128xf32, #tpu.memory_space<vmem>>, %arg6: memref<128x128xf32, #tpu.memory_space<vmem>>, %arg7: memref<128x128xf32, #tpu.memory_space<vmem>>, %arg8: memref<128x128xf32, #tpu.memory_space<vmem>>) attributes {dimension_semantics = [#tpu.dimension_semantics<parallel>], iteration_bounds = array<i64: 1>, scalar_prefetch = 0 : i64, scratch_operands = 0 : i64, tpu.core_type = #tpu.core_type<tc>, window_params = [{transform_indices = @transform_0, window_bounds = array<i64: 128, 128>}, {pipeline_mode = #tpu.pipeline_mode<synchronous>, transform_indices = @transform_1, window_bounds = array<i64: 1, 128>}, {pipeline_mode = #tpu.pipeline_mode<synchronous>, transform_indices = @transform_2, window_bounds = array<i64: 1, 128>}, {pipeline_mode = #tpu.pipeline_mode<synchronous>, transform_indices = @transform_3, window_bounds = array<i64: 1, 128>}, {pipeline_mode = #tpu.pipeline_mode<synchronous>, transform_indices = @transform_4, window_bounds = array<i64: 1, 128>}, {transform_indices = @transform_5, window_bounds = array<i64: 128, 128>}, {transform_indices = @transform_6, window_bounds = array<i64: 128, 128>}, {transform_indices = @transform_7, window_bounds = array<i64: 128, 128>}]} {
    %c0 = arith.constant 0 : index
    %c0_0 = arith.constant 0 : index
    %0 = vector.load %arg1[%c0, %c0_0] : memref<128x128xf32, #tpu.memory_space<vmem>>, vector<128x128xf32>
    %c0_1 = arith.constant 0 : index
    %c0_2 = arith.constant 0 : index
    %1 = vector.load %arg2[%c0_1, %c0_2] : memref<1x128xf32, #tpu.memory_space<vmem>>, vector<1x128xf32>
    %2 = vector.broadcast %1 : vector<1x128xf32> to vector<128x128xf32>
    %3 = arith.subf %0, %2 : vector<128x128xf32>
    %c0_3 = arith.constant 0 : index
    %c0_4 = arith.constant 0 : index
    %4 = vector.load %arg3[%c0_3, %c0_4] : memref<1x128xf32, #tpu.memory_space<vmem>>, vector<1x128xf32>
    %5 = vector.broadcast %4 : vector<1x128xf32> to vector<128x128xf32>
    %6 = arith.mulf %3, %5 : vector<128x128xf32>
    %c0_5 = arith.constant 0 : index
    %c0_6 = arith.constant 0 : index
    %7 = vector.load %arg4[%c0_5, %c0_6] : memref<1x128xf32, #tpu.memory_space<vmem>>, vector<1x128xf32>
    %8 = vector.broadcast %7 : vector<1x128xf32> to vector<128x128xf32>
    %9 = arith.mulf %6, %8 : vector<128x128xf32>
    %c0_7 = arith.constant 0 : index
    %c0_8 = arith.constant 0 : index
    %10 = vector.load %arg5[%c0_7, %c0_8] : memref<1x128xf32, #tpu.memory_space<vmem>>, vector<1x128xf32>
    %11 = vector.broadcast %10 : vector<1x128xf32> to vector<128x128xf32>
    %12 = arith.addf %9, %11 : vector<128x128xf32>
    %cst = arith.constant 0.000000e+00 : f32
    %13 = vector.broadcast %cst : f32 to vector<128x128xf32>
    %14 = arith.maximumf %12, %13 : vector<128x128xf32>
    %c0_9 = arith.constant 0 : index
    %c0_10 = arith.constant 0 : index
    %15 = vector.load %arg7[%c0_9, %c0_10] : memref<128x128xf32, #tpu.memory_space<vmem>>, vector<128x128xf32>
    tpu.vector_store %arg7[%c0_9, %c0_10], %14 {strides = array<i32>} : memref<128x128xf32, #tpu.memory_space<vmem>>, vector<128x128xf32>,
    %c0_11 = arith.constant 0 : index
    %c0_12 = arith.constant 0 : index
    %16 = vector.load %arg6[%c0_11, %c0_12] : memref<128x128xf32, #tpu.memory_space<vmem>>, vector<128x128xf32>
    %17 = arith.addf %16, %14 : vector<128x128xf32>
    %c0_13 = arith.constant 0 : index
    %c0_14 = arith.constant 0 : index
    %18 = vector.load %arg8[%c0_13, %c0_14] : memref<128x128xf32, #tpu.memory_space<vmem>>, vector<128x128xf32>
    tpu.vector_store %arg8[%c0_13, %c0_14], %17 {strides = array<i32>} : memref<128x128xf32, #tpu.memory_space<vmem>>, vector<128x128xf32>,
    return
  }
  func.func @transform_0(%arg0: i32) -> (i32, i32) {
    %c0_i32 = arith.constant 0 : i32
    %c0_i32_0 = arith.constant 0 : i32
    return %arg0, %c0_i32 : i32, i32
  }
  func.func @transform_1(%arg0: i32) -> (i32, i32) {
    %c0_i32 = arith.constant 0 : i32
    %c0_i32_0 = arith.constant 0 : i32
    %c0_i32_1 = arith.constant 0 : i32
    return %c0_i32, %c0_i32_0 : i32, i32
  }
  func.func @transform_2(%arg0: i32) -> (i32, i32) {
    %c0_i32 = arith.constant 0 : i32
    %c0_i32_0 = arith.constant 0 : i32
    %c0_i32_1 = arith.constant 0 : i32
    return %c0_i32, %c0_i32_0 : i32, i32
  }
  func.func @transform_3(%arg0: i32) -> (i32, i32) {
    %c0_i32 = arith.constant 0 : i32
    %c0_i32_0 = arith.constant 0 : i32
    %c0_i32_1 = arith.constant 0 : i32
    return %c0_i32, %c0_i32_0 : i32, i32
  }
  func.func @transform_4(%arg0: i32) -> (i32, i32) {
    %c0_i32 = arith.constant 0 : i32
    %c0_i32_0 = arith.constant 0 : i32
    %c0_i32_1 = arith.constant 0 : i32
    return %c0_i32, %c0_i32_0 : i32, i32
  }
  func.func @transform_5(%arg0: i32) -> (i32, i32) {
    %c0_i32 = arith.constant 0 : i32
    %c0_i32_0 = arith.constant 0 : i32
    return %arg0, %c0_i32 : i32, i32
  }
  func.func @transform_6(%arg0: i32) -> (i32, i32) {
    %c0_i32 = arith.constant 0 : i32
    %c0_i32_0 = arith.constant 0 : i32
    return %arg0, %c0_i32 : i32, i32
  }
  func.func @transform_7(%arg0: i32) -> (i32, i32) {
    %c0_i32 = arith.constant 0 : i32
    %c0_i32_0 = arith.constant 0 : i32
    return %arg0, %c0_i32 : i32, i32
  }
}

module attributes {stable_mosaic.version = 11 : i64} {
  func.func @_bn_relu_skip_kernel(%arg0: i32, %arg1: memref<128x128xf32, #tpu.memory_space<vmem>>, %arg2: memref<1x128xf32, #tpu.memory_space<vmem>>, %arg3: memref<1x128xf32, #tpu.memory_space<vmem>>, %arg4: memref<1x128xf32, #tpu.memory_space<vmem>>, %arg5: memref<1x128xf32, #tpu.memory_space<vmem>>, %arg6: memref<128x128xf32, #tpu.memory_space<vmem>>, %arg7: memref<128x128xf32, #tpu.memory_space<vmem>>, %arg8: memref<128x128xf32, #tpu.memory_space<vmem>>) attributes {dimension_semantics = [#tpu.dimension_semantics<parallel>], iteration_bounds = array<i64: 1>, scalar_prefetch = 0 : i64, scratch_operands = 0 : i64, tpu.core_type = #tpu.core_type<tc>, window_params = [{transform_indices = @transform_0, window_bounds = array<i64: 128, 128>}, {pipeline_mode = #tpu.pipeline_mode<synchronous>, transform_indices = @transform_1, window_bounds = array<i64: 1, 128>}, {pipeline_mode = #tpu.pipeline_mode<synchronous>, transform_indices = @transform_2, window_bounds = array<i64: 1, 128>}, {pipeline_mode = #tpu.pipeline_mode<synchronous>, transform_indices = @transform_3, window_bounds = array<i64: 1, 128>}, {pipeline_mode = #tpu.pipeline_mode<synchronous>, transform_indices = @transform_4, window_bounds = array<i64: 1, 128>}, {transform_indices = @transform_5, window_bounds = array<i64: 128, 128>}, {transform_indices = @transform_6, window_bounds = array<i64: 128, 128>}, {transform_indices = @transform_7, window_bounds = array<i64: 128, 128>}]} {
    %c0 = arith.constant 0 : index
    %c0_0 = arith.constant 0 : index
    %0 = vector.load %arg1[%c0, %c0_0] : memref<128x128xf32, #tpu.memory_space<vmem>>, vector<128x128xf32>
    %c0_1 = arith.constant 0 : index
    %c0_2 = arith.constant 0 : index
    %1 = vector.load %arg2[%c0_1, %c0_2] : memref<1x128xf32, #tpu.memory_space<vmem>>, vector<1x128xf32>
    %2 = vector.broadcast %1 : vector<1x128xf32> to vector<128x128xf32>
    %3 = arith.subf %0, %2 : vector<128x128xf32>
    %c0_3 = arith.constant 0 : index
    %c0_4 = arith.constant 0 : index
    %4 = vector.load %arg3[%c0_3, %c0_4] : memref<1x128xf32, #tpu.memory_space<vmem>>, vector<1x128xf32>
    %5 = vector.broadcast %4 : vector<1x128xf32> to vector<128x128xf32>
    %6 = arith.mulf %3, %5 : vector<128x128xf32>
    %c0_5 = arith.constant 0 : index
    %c0_6 = arith.constant 0 : index
    %7 = vector.load %arg4[%c0_5, %c0_6] : memref<1x128xf32, #tpu.memory_space<vmem>>, vector<1x128xf32>
    %8 = vector.broadcast %7 : vector<1x128xf32> to vector<128x128xf32>
    %9 = arith.mulf %6, %8 : vector<128x128xf32>
    %c0_7 = arith.constant 0 : index
    %c0_8 = arith.constant 0 : index
    %10 = vector.load %arg5[%c0_7, %c0_8] : memref<1x128xf32, #tpu.memory_space<vmem>>, vector<1x128xf32>
    %11 = vector.broadcast %10 : vector<1x128xf32> to vector<128x128xf32>
    %12 = arith.addf %9, %11 : vector<128x128xf32>
    %cst = arith.constant 0.000000e+00 : f32
    %13 = vector.broadcast %cst : f32 to vector<128x128xf32>
    %14 = arith.maximumf %12, %13 : vector<128x128xf32>
    %c0_9 = arith.constant 0 : index
    %c0_10 = arith.constant 0 : index
    %15 = vector.load %arg7[%c0_9, %c0_10] : memref<128x128xf32, #tpu.memory_space<vmem>>, vector<128x128xf32>
    tpu.vector_store %arg7[%c0_9, %c0_10], %14 {strides = array<i32>} : memref<128x128xf32, #tpu.memory_space<vmem>>, vector<128x128xf32>,
    %c0_11 = arith.constant 0 : index
    %c0_12 = arith.constant 0 : index
    %16 = vector.load %arg6[%c0_11, %c0_12] : memref<128x128xf32, #tpu.memory_space<vmem>>, vector<128x128xf32>
    %17 = arith.addf %16, %14 : vector<128x128xf32>
    %c0_13 = arith.constant 0 : index
    %c0_14 = arith.constant 0 : index
    %18 = vector.load %arg8[%c0_13, %c0_14] : memref<128x128xf32, #tpu.memory_space<vmem>>, vector<128x128xf32>
    tpu.vector_store %arg8[%c0_13, %c0_14], %17 {strides = array<i32>} : memref<128x128xf32, #tpu.memory_space<vmem>>, vector<128x128xf32>,
    return
  }
  func.func @transform_0(%arg0: i32) -> (i32, i32) {
    %c0_i32 = arith.constant 0 : i32
    %c0_i32_0 = arith.constant 0 : i32
    return %arg0, %c0_i32 : i32, i32
  }
  func.func @transform_1(%arg0: i32) -> (i32, i32) {
    %c0_i32 = arith.constant 0 : i32
    %c0_i32_0 = arith.constant 0 : i32
    %c0_i32_1 = arith.constant 0 : i32
    return %c0_i32, %c0_i32_0 : i32, i32
  }
  func.func @transform_2(%arg0: i32) -> (i32, i32) {
    %c0_i32 = arith.constant 0 : i32
    %c0_i32_0 = arith.constant 0 : i32
    %c0_i32_1 = arith.constant 0 : i32
    return %c0_i32, %c0_i32_0 : i32, i32
  }
  func.func @transform_3(%arg0: i32) -> (i32, i32) {
    %c0_i32 = arith.constant 0 : i32
    %c0_i32_0 = arith.constant 0 : i32
    %c0_i32_1 = arith.constant 0 : i32
    return %c0_i32, %c0_i32_0 : i32, i32
  }
  func.func @transform_4(%arg0: i32) -> (i32, i32) {
    %c0_i32 = arith.constant 0 : i32
    %c0_i32_0 = arith.constant 0 : i32
    %c0_i32_1 = arith.constant 0 : i32
    return %c0_i32, %c0_i32_0 : i32, i32
  }
  func.func @transform_5(%arg0: i32) -> (i32, i32) {
    %c0_i32 = arith.constant 0 : i32
    %c0_i32_0 = arith.constant 0 : i32
    return %arg0, %c0_i32 : i32, i32
  }
  func.func @transform_6(%arg0: i32) -> (i32, i32) {
    %c0_i32 = arith.constant 0 : i32
    %c0_i32_0 = arith.constant 0 : i32
    return %arg0, %c0_i32 : i32, i32
  }
  func.func @transform_7(%arg0: i32) -> (i32, i32) {
    %c0_i32 = arith.constant 0 : i32
    %c0_i32_0 = arith.constant 0 : i32
    return %arg0, %c0_i32 : i32, i32
  }
}

module attributes {stable_mosaic.version = 11 : i64} {
  func.func @_decoder_kernel(%arg0: i32, %arg1: memref<16xi32, #tpu.memory_space<smem>>, %arg2: memref<16xi32, #tpu.memory_space<smem>>, %arg3: memref<128x128xf32, #tpu.memory_space<vmem>>, %arg4: memref<128x128xf32, #tpu.memory_space<vmem>>, %arg5: memref<128x128xf32, #tpu.memory_space<vmem>>, %arg6: memref<1x128xf32, #tpu.memory_space<vmem>>, %arg7: memref<8x128xf32, #tpu.memory_space<vmem>>, %arg8: memref<8x128xf32, #tpu.memory_space<vmem>>, %arg9: memref<8x128xf32, #tpu.memory_space<vmem>>) attributes {dimension_semantics = [#tpu.dimension_semantics<arbitrary>], iteration_bounds = array<i64: 2>, scalar_prefetch = 2 : i64, scratch_operands = 2 : i64, tpu.core_type = #tpu.core_type<tc>, window_params = [{pipeline_mode = #tpu.pipeline_mode<synchronous>, transform_indices = @transform_0, window_bounds = array<i64: 128, 128>}, {pipeline_mode = #tpu.pipeline_mode<synchronous>, transform_indices = @transform_1, window_bounds = array<i64: 128, 128>}, {pipeline_mode = #tpu.pipeline_mode<synchronous>, transform_indices = @transform_2, window_bounds = array<i64: 128, 128>}, {pipeline_mode = #tpu.pipeline_mode<synchronous>, transform_indices = @transform_3, window_bounds = array<i64: 1, 128>}, {transform_indices = @transform_4, window_bounds = array<i64: 8, 128>}]} {
    %c8_i32 = arith.constant 8 : i32
    %0 = arith.muli %arg0, %c8_i32 : i32
    %c0_i32 = arith.constant 0 : i32
    %1 = arith.addi %0, %c0_i32 : i32
    %2 = arith.index_cast %1 : i32 to index
    %3 = memref.load %arg1[%2] : memref<16xi32, #tpu.memory_space<smem>>
    %4 = arith.index_cast %3 : i32 to index
    %c0 = arith.constant 0 : index
    %5 = vector.load %arg3[%4, %c0] : memref<128x128xf32, #tpu.memory_space<vmem>>, vector<1x128xf32>
    %c0_0 = arith.constant 0 : index
    %c0_1 = arith.constant 0 : index
    %6 = vector.load %arg8[%c0_0, %c0_1] : memref<8x128xf32, #tpu.memory_space<vmem>>, vector<1x128xf32>
    tpu.vector_store %arg8[%c0_0, %c0_1], %5 {strides = array<i32>} : memref<8x128xf32, #tpu.memory_space<vmem>>, vector<1x128xf32>,
    %c0_i32_2 = arith.constant 0 : i32
    %7 = arith.addi %0, %c0_i32_2 : i32
    %8 = arith.index_cast %7 : i32 to index
    %9 = memref.load %arg2[%8] : memref<16xi32, #tpu.memory_space<smem>>
    %10 = arith.index_cast %9 : i32 to index
    %c0_3 = arith.constant 0 : index
    %11 = vector.load %arg3[%10, %c0_3] : memref<128x128xf32, #tpu.memory_space<vmem>>, vector<1x128xf32>
    %c0_4 = arith.constant 0 : index
    %c0_5 = arith.constant 0 : index
    %12 = vector.load %arg9[%c0_4, %c0_5] : memref<8x128xf32, #tpu.memory_space<vmem>>, vector<1x128xf32>
    tpu.vector_store %arg9[%c0_4, %c0_5], %11 {strides = array<i32>} : memref<8x128xf32, #tpu.memory_space<vmem>>, vector<1x128xf32>,
    %c1_i32 = arith.constant 1 : i32
    %13 = arith.addi %0, %c1_i32 : i32
    %14 = arith.index_cast %13 : i32 to index
    %15 = memref.load %arg1[%14] : memref<16xi32, #tpu.memory_space<smem>>
    %16 = arith.index_cast %15 : i32 to index
    %c0_6 = arith.constant 0 : index
    %17 = vector.load %arg3[%16, %c0_6] : memref<128x128xf32, #tpu.memory_space<vmem>>, vector<1x128xf32>
    %c1 = arith.constant 1 : index
    %c0_7 = arith.constant 0 : index
    %18 = vector.load %arg8[%c1, %c0_7] : memref<8x128xf32, #tpu.memory_space<vmem>>, vector<1x128xf32>
    tpu.vector_store %arg8[%c1, %c0_7], %17 {strides = array<i32>} : memref<8x128xf32, #tpu.memory_space<vmem>>, vector<1x128xf32>,
    %c1_i32_8 = arith.constant 1 : i32
    %19 = arith.addi %0, %c1_i32_8 : i32
    %20 = arith.index_cast %19 : i32 to index
    %21 = memref.load %arg2[%20] : memref<16xi32, #tpu.memory_space<smem>>
    %22 = arith.index_cast %21 : i32 to index
    %c0_9 = arith.constant 0 : index
    %23 = vector.load %arg3[%22, %c0_9] : memref<128x128xf32, #tpu.memory_space<vmem>>, vector<1x128xf32>
    %c1_10 = arith.constant 1 : index
    %c0_11 = arith.constant 0 : index
    %24 = vector.load %arg9[%c1_10, %c0_11] : memref<8x128xf32, #tpu.memory_space<vmem>>, vector<1x128xf32>
    tpu.vector_store %arg9[%c1_10, %c0_11], %23 {strides = array<i32>} : memref<8x128xf32, #tpu.memory_space<vmem>>, vector<1x128xf32>,
    %c2_i32 = arith.constant 2 : i32
    %25 = arith.addi %0, %c2_i32 : i32
    %26 = arith.index_cast %25 : i32 to index
    %27 = memref.load %arg1[%26] : memref<16xi32, #tpu.memory_space<smem>>
    %28 = arith.index_cast %27 : i32 to index
    %c0_12 = arith.constant 0 : index
    %29 = vector.load %arg3[%28, %c0_12] : memref<128x128xf32, #tpu.memory_space<vmem>>, vector<1x128xf32>
    %c2 = arith.constant 2 : index
    %c0_13 = arith.constant 0 : index
    %30 = vector.load %arg8[%c2, %c0_13] : memref<8x128xf32, #tpu.memory_space<vmem>>, vector<1x128xf32>
    tpu.vector_store %arg8[%c2, %c0_13], %29 {strides = array<i32>} : memref<8x128xf32, #tpu.memory_space<vmem>>, vector<1x128xf32>,
    %c2_i32_14 = arith.constant 2 : i32
    %31 = arith.addi %0, %c2_i32_14 : i32
    %32 = arith.index_cast %31 : i32 to index
    %33 = memref.load %arg2[%32] : memref<16xi32, #tpu.memory_space<smem>>
    %34 = arith.index_cast %33 : i32 to index
    %c0_15 = arith.constant 0 : index
    %35 = vector.load %arg3[%34, %c0_15] : memref<128x128xf32, #tpu.memory_space<vmem>>, vector<1x128xf32>
    %c2_16 = arith.constant 2 : index
    %c0_17 = arith.constant 0 : index
    %36 = vector.load %arg9[%c2_16, %c0_17] : memref<8x128xf32, #tpu.memory_space<vmem>>, vector<1x128xf32>
    tpu.vector_store %arg9[%c2_16, %c0_17], %35 {strides = array<i32>} : memref<8x128xf32, #tpu.memory_space<vmem>>, vector<1x128xf32>,
    %c3_i32 = arith.constant 3 : i32
    %37 = arith.addi %0, %c3_i32 : i32
    %38 = arith.index_cast %37 : i32 to index
    %39 = memref.load %arg1[%38] : memref<16xi32, #tpu.memory_space<smem>>
    %40 = arith.index_cast %39 : i32 to index
    %c0_18 = arith.constant 0 : index
    %41 = vector.load %arg3[%40, %c0_18] : memref<128x128xf32, #tpu.memory_space<vmem>>, vector<1x128xf32>
    %c3 = arith.constant 3 : index
    %c0_19 = arith.constant 0 : index
    %42 = vector.load %arg8[%c3, %c0_19] : memref<8x128xf32, #tpu.memory_space<vmem>>, vector<1x128xf32>
    tpu.vector_store %arg8[%c3, %c0_19], %41 {strides = array<i32>} : memref<8x128xf32, #tpu.memory_space<vmem>>, vector<1x128xf32>,
    %c3_i32_20 = arith.constant 3 : i32
    %43 = arith.addi %0, %c3_i32_20 : i32
    %44 = arith.index_cast %43 : i32 to index
    %45 = memref.load %arg2[%44] : memref<16xi32, #tpu.memory_space<smem>>
    %46 = arith.index_cast %45 : i32 to index
    %c0_21 = arith.constant 0 : index
    %47 = vector.load %arg3[%46, %c0_21] : memref<128x128xf32, #tpu.memory_space<vmem>>, vector<1x128xf32>
    %c3_22 = arith.constant 3 : index
    %c0_23 = arith.constant 0 : index
    %48 = vector.load %arg9[%c3_22, %c0_23] : memref<8x128xf32, #tpu.memory_space<vmem>>, vector<1x128xf32>
    tpu.vector_store %arg9[%c3_22, %c0_23], %47 {strides = array<i32>} : memref<8x128xf32, #tpu.memory_space<vmem>>, vector<1x128xf32>,
    %c4_i32 = arith.constant 4 : i32
    %49 = arith.addi %0, %c4_i32 : i32
    %50 = arith.index_cast %49 : i32 to index
    %51 = memref.load %arg1[%50] : memref<16xi32, #tpu.memory_space<smem>>
    %52 = arith.index_cast %51 : i32 to index
    %c0_24 = arith.constant 0 : index
    %53 = vector.load %arg3[%52, %c0_24] : memref<128x128xf32, #tpu.memory_space<vmem>>, vector<1x128xf32>
    %c4 = arith.constant 4 : index
    %c0_25 = arith.constant 0 : index
    %54 = vector.load %arg8[%c4, %c0_25] : memref<8x128xf32, #tpu.memory_space<vmem>>, vector<1x128xf32>
    tpu.vector_store %arg8[%c4, %c0_25], %53 {strides = array<i32>} : memref<8x128xf32, #tpu.memory_space<vmem>>, vector<1x128xf32>,
    %c4_i32_26 = arith.constant 4 : i32
    %55 = arith.addi %0, %c4_i32_26 : i32
    %56 = arith.index_cast %55 : i32 to index
    %57 = memref.load %arg2[%56] : memref<16xi32, #tpu.memory_space<smem>>
    %58 = arith.index_cast %57 : i32 to index
    %c0_27 = arith.constant 0 : index
    %59 = vector.load %arg3[%58, %c0_27] : memref<128x128xf32, #tpu.memory_space<vmem>>, vector<1x128xf32>
    %c4_28 = arith.constant 4 : index
    %c0_29 = arith.constant 0 : index
    %60 = vector.load %arg9[%c4_28, %c0_29] : memref<8x128xf32, #tpu.memory_space<vmem>>, vector<1x128xf32>
    tpu.vector_store %arg9[%c4_28, %c0_29], %59 {strides = array<i32>} : memref<8x128xf32, #tpu.memory_space<vmem>>, vector<1x128xf32>,
    %c5_i32 = arith.constant 5 : i32
    %61 = arith.addi %0, %c5_i32 : i32
    %62 = arith.index_cast %61 : i32 to index
    %63 = memref.load %arg1[%62] : memref<16xi32, #tpu.memory_space<smem>>
    %64 = arith.index_cast %63 : i32 to index
    %c0_30 = arith.constant 0 : index
    %65 = vector.load %arg3[%64, %c0_30] : memref<128x128xf32, #tpu.memory_space<vmem>>, vector<1x128xf32>
    %c5 = arith.constant 5 : index
    %c0_31 = arith.constant 0 : index
    %66 = vector.load %arg8[%c5, %c0_31] : memref<8x128xf32, #tpu.memory_space<vmem>>, vector<1x128xf32>
    tpu.vector_store %arg8[%c5, %c0_31], %65 {strides = array<i32>} : memref<8x128xf32, #tpu.memory_space<vmem>>, vector<1x128xf32>,
    %c5_i32_32 = arith.constant 5 : i32
    %67 = arith.addi %0, %c5_i32_32 : i32
    %68 = arith.index_cast %67 : i32 to index
    %69 = memref.load %arg2[%68] : memref<16xi32, #tpu.memory_space<smem>>
    %70 = arith.index_cast %69 : i32 to index
    %c0_33 = arith.constant 0 : index
    %71 = vector.load %arg3[%70, %c0_33] : memref<128x128xf32, #tpu.memory_space<vmem>>, vector<1x128xf32>
    %c5_34 = arith.constant 5 : index
    %c0_35 = arith.constant 0 : index
    %72 = vector.load %arg9[%c5_34, %c0_35] : memref<8x128xf32, #tpu.memory_space<vmem>>, vector<1x128xf32>
    tpu.vector_store %arg9[%c5_34, %c0_35], %71 {strides = array<i32>} : memref<8x128xf32, #tpu.memory_space<vmem>>, vector<1x128xf32>,
    %c6_i32 = arith.constant 6 : i32
    %73 = arith.addi %0, %c6_i32 : i32
    %74 = arith.index_cast %73 : i32 to index
    %75 = memref.load %arg1[%74] : memref<16xi32, #tpu.memory_space<smem>>
    %76 = arith.index_cast %75 : i32 to index
    %c0_36 = arith.constant 0 : index
    %77 = vector.load %arg3[%76, %c0_36] : memref<128x128xf32, #tpu.memory_space<vmem>>, vector<1x128xf32>
    %c6 = arith.constant 6 : index
    %c0_37 = arith.constant 0 : index
    %78 = vector.load %arg8[%c6, %c0_37] : memref<8x128xf32, #tpu.memory_space<vmem>>, vector<1x128xf32>
    tpu.vector_store %arg8[%c6, %c0_37], %77 {strides = array<i32>} : memref<8x128xf32, #tpu.memory_space<vmem>>, vector<1x128xf32>,
    %c6_i32_38 = arith.constant 6 : i32
    %79 = arith.addi %0, %c6_i32_38 : i32
    %80 = arith.index_cast %79 : i32 to index
    %81 = memref.load %arg2[%80] : memref<16xi32, #tpu.memory_space<smem>>
    %82 = arith.index_cast %81 : i32 to index
    %c0_39 = arith.constant 0 : index
    %83 = vector.load %arg3[%82, %c0_39] : memref<128x128xf32, #tpu.memory_space<vmem>>, vector<1x128xf32>
    %c6_40 = arith.constant 6 : index
    %c0_41 = arith.constant 0 : index
    %84 = vector.load %arg9[%c6_40, %c0_41] : memref<8x128xf32, #tpu.memory_space<vmem>>, vector<1x128xf32>
    tpu.vector_store %arg9[%c6_40, %c0_41], %83 {strides = array<i32>} : memref<8x128xf32, #tpu.memory_space<vmem>>, vector<1x128xf32>,
    %c7_i32 = arith.constant 7 : i32
    %85 = arith.addi %0, %c7_i32 : i32
    %86 = arith.index_cast %85 : i32 to index
    %87 = memref.load %arg1[%86] : memref<16xi32, #tpu.memory_space<smem>>
    %88 = arith.index_cast %87 : i32 to index
    %c0_42 = arith.constant 0 : index
    %89 = vector.load %arg3[%88, %c0_42] : memref<128x128xf32, #tpu.memory_space<vmem>>, vector<1x128xf32>
    %c7 = arith.constant 7 : index
    %c0_43 = arith.constant 0 : index
    %90 = vector.load %arg8[%c7, %c0_43] : memref<8x128xf32, #tpu.memory_space<vmem>>, vector<1x128xf32>
    tpu.vector_store %arg8[%c7, %c0_43], %89 {strides = array<i32>} : memref<8x128xf32, #tpu.memory_space<vmem>>, vector<1x128xf32>,
    %c7_i32_44 = arith.constant 7 : i32
    %91 = arith.addi %0, %c7_i32_44 : i32
    %92 = arith.index_cast %91 : i32 to index
    %93 = memref.load %arg2[%92] : memref<16xi32, #tpu.memory_space<smem>>
    %94 = arith.index_cast %93 : i32 to index
    %c0_45 = arith.constant 0 : index
    %95 = vector.load %arg3[%94, %c0_45] : memref<128x128xf32, #tpu.memory_space<vmem>>, vector<1x128xf32>
    %c7_46 = arith.constant 7 : index
    %c0_47 = arith.constant 0 : index
    %96 = vector.load %arg9[%c7_46, %c0_47] : memref<8x128xf32, #tpu.memory_space<vmem>>, vector<1x128xf32>
    tpu.vector_store %arg9[%c7_46, %c0_47], %95 {strides = array<i32>} : memref<8x128xf32, #tpu.memory_space<vmem>>, vector<1x128xf32>,
    %c0_48 = arith.constant 0 : index
    %c0_49 = arith.constant 0 : index
    %97 = vector.load %arg8[%c0_48, %c0_49] : memref<8x128xf32, #tpu.memory_space<vmem>>, vector<8x128xf32>
    %c0_50 = arith.constant 0 : index
    %c0_51 = arith.constant 0 : index
    %98 = vector.load %arg4[%c0_50, %c0_51] : memref<128x128xf32, #tpu.memory_space<vmem>>, vector<128x128xf32>
    %cst = arith.constant dense<0.000000e+00> : vector<8x128xf32>
    %99 = tpu.matmul %97, %98, %cst {dimension_numbers = #tpu.dot_dimension_numbers<[1], [0], [0], [1], [0, 0, 1, 1], [], []>} : vector<8x128xf32>, vector<128x128xf32>, vector<8x128xf32> -> vector<8x128xf32>
    %c0_52 = arith.constant 0 : index
    %c0_53 = arith.constant 0 : index
    %100 = vector.load %arg9[%c0_52, %c0_53] : memref<8x128xf32, #tpu.memory_space<vmem>>, vector<8x128xf32>
    %c0_54 = arith.constant 0 : index
    %c0_55 = arith.constant 0 : index
    %101 = vector.load %arg5[%c0_54, %c0_55] : memref<128x128xf32, #tpu.memory_space<vmem>>, vector<128x128xf32>
    %cst_56 = arith.constant dense<0.000000e+00> : vector<8x128xf32>
    %102 = tpu.matmul %100, %101, %cst_56 {dimension_numbers = #tpu.dot_dimension_numbers<[1], [0], [0], [1], [0, 0, 1, 1], [], []>} : vector<8x128xf32>, vector<128x128xf32>, vector<8x128xf32> -> vector<8x128xf32>
    %103 = arith.addf %99, %102 : vector<8x128xf32>
    %c0_57 = arith.constant 0 : index
    %c0_58 = arith.constant 0 : index
    %104 = vector.load %arg6[%c0_57, %c0_58] : memref<1x128xf32, #tpu.memory_space<vmem>>, vector<1x128xf32>
    %105 = vector.broadcast %104 : vector<1x128xf32> to vector<8x128xf32>
    %106 = arith.addf %103, %105 : vector<8x128xf32>
    %c0_59 = arith.constant 0 : index
    %c0_60 = arith.constant 0 : index
    %107 = vector.load %arg7[%c0_59, %c0_60] : memref<8x128xf32, #tpu.memory_space<vmem>>, vector<8x128xf32>
    tpu.vector_store %arg7[%c0_59, %c0_60], %106 {strides = array<i32>} : memref<8x128xf32, #tpu.memory_space<vmem>>, vector<8x128xf32>,
    return
  }
  func.func @transform_0(%arg0: i32, %arg1: memref<16xi32, #tpu.memory_space<smem>>, %arg2: memref<16xi32, #tpu.memory_space<smem>>) -> (i32, i32) {
    %c0_i32 = arith.constant 0 : i32
    %c0_i32_0 = arith.constant 0 : i32
    %c0_i32_1 = arith.constant 0 : i32
    return %c0_i32, %c0_i32_0 : i32, i32
  }
  func.func @transform_1(%arg0: i32, %arg1: memref<16xi32, #tpu.memory_space<smem>>, %arg2: memref<16xi32, #tpu.memory_space<smem>>) -> (i32, i32) {
    %c0_i32 = arith.constant 0 : i32
    %c0_i32_0 = arith.constant 0 : i32
    %c0_i32_1 = arith.constant 0 : i32
    return %c0_i32, %c0_i32_0 : i32, i32
  }
  func.func @transform_2(%arg0: i32, %arg1: memref<16xi32, #tpu.memory_space<smem>>, %arg2: memref<16xi32, #tpu.memory_space<smem>>) -> (i32, i32) {
    %c0_i32 = arith.constant 0 : i32
    %c0_i32_0 = arith.constant 0 : i32
    %c0_i32_1 = arith.constant 0 : i32
    return %c0_i32, %c0_i32_0 : i32, i32
  }
  func.func @transform_3(%arg0: i32, %arg1: memref<16xi32, #tpu.memory_space<smem>>, %arg2: memref<16xi32, #tpu.memory_space<smem>>) -> (i32, i32) {
    %c0_i32 = arith.constant 0 : i32
    %c0_i32_0 = arith.constant 0 : i32
    %c0_i32_1 = arith.constant 0 : i32
    return %c0_i32, %c0_i32_0 : i32, i32
  }
  func.func @transform_4(%arg0: i32, %arg1: memref<16xi32, #tpu.memory_space<smem>>, %arg2: memref<16xi32, #tpu.memory_space<smem>>) -> (i32, i32) {
    %c0_i32 = arith.constant 0 : i32
    %c0_i32_0 = arith.constant 0 : i32
    return %arg0, %c0_i32 : i32, i32
  }
}

</mosaic_0001>

<llo_original>
// kernel: gcn_forward.7
$region0: #{gcn_forward.7}
  #allocation0 [shape = 'u32[]', space=smem, size = 0x4, offset = 0x4, fixed_abs, tag = 'smem constant byte address 0x4 - core index']
  #allocation1 [shape = 'u32[144,128]{1,0:T(1,128)}', space=vmem, size = 0x12000, scoped, tag = 'internal scratch']
  %s0 = inlined_call_operand.vmem [shape: f32[128,128], index: 0, kind: input, shape index: {}]
  %s1 = inlined_call_operand.vmem [shape: f32[128,128], index: 1, kind: input, shape index: {}]
  %s2 = inlined_call_operand.vmem [shape: bf16[128,128], index: 2, kind: output, shape index: {}]
  %s3 = sld [smem:[#allocation0]]
  $region18: #{gcn_forward.7} parent=0
    _
  %s5 = ssub.s32 1, %s3
  %s6 = scalar_select 0, %s5, %s3
  // Predicated region
  $region2: #{gcn_forward.7} parent=0 // pred_check
    _
  $region3: #{gcn_forward.7} parent=0 // pred_check_branch
    %8 = sbr.rel (0) target = $region5
  $region4: #{gcn_forward.7} parent=0 // pred_region
    _
  $region5: #{gcn_forward.7} parent=0 // pred_fallthru
    _
  // Predicated region
  $region6: #{gcn_forward.7} parent=0 // pred_check
    _
  $region7: #{gcn_forward.7} parent=0 // pred_check_branch
    %10 = sbr.rel (0) target = $region9
  $region8: #{gcn_forward.7} parent=0 // pred_region
    _
  $region9: #{gcn_forward.7} parent=0 // pred_fallthru
    _
  %v11 = vld [vmem:[%s0] sm:$0xff]
  %v12 = vld [vmem:[%s0 + $0x8] sm:$0xff]
  %v13 = vld [vmem:[%s0 + $0x10] sm:$0xff]
  %v14 = vld [vmem:[%s0 + $0x18] sm:$0xff]
  %v15 = vld [vmem:[%s0 + $0x20] sm:$0xff]
  %v16 = vld [vmem:[%s0 + $0x28] sm:$0xff]
  %v17 = vld [vmem:[%s0 + $0x30] sm:$0xff]
  %v18 = vld [vmem:[%s0 + $0x38] sm:$0xff]
  %v19 = vld [vmem:[%s0 + $0x40] sm:$0xff]
  %v20 = vld [vmem:[%s0 + $0x48] sm:$0xff]
  %v21 = vld [vmem:[%s0 + $0x50] sm:$0xff]
  %v22 = vld [vmem:[%s0 + $0x58] sm:$0xff]
  %v23 = vld [vmem:[%s0 + $0x60] sm:$0xff]
  %v24 = vld [vmem:[%s0 + $0x68] sm:$0xff]
  %v25 = vld [vmem:[%s0 + $0x70] sm:$0xff]
  %v26 = vld [vmem:[%s0 + $0x78] sm:$0xff]
  %v27 = vld [vmem:[%s1] sm:$0xff]
  %v28 = vld [vmem:[%s1 + $0x8] sm:$0xff]
  %v29 = vld [vmem:[%s1 + $0x10] sm:$0xff]
  %v30 = vld [vmem:[%s1 + $0x18] sm:$0xff]
  %v31 = vld [vmem:[%s1 + $0x20] sm:$0xff]
  %v32 = vld [vmem:[%s1 + $0x28] sm:$0xff]
  %v33 = vld [vmem:[%s1 + $0x30] sm:$0xff]
  %v34 = vld [vmem:[%s1 + $0x38] sm:$0xff]
  %v35 = vld [vmem:[%s1 + $0x40] sm:$0xff]
  %v36 = vld [vmem:[%s1 + $0x48] sm:$0xff]
  %v37 = vld [vmem:[%s1 + $0x50] sm:$0xff]
  %v38 = vld [vmem:[%s1 + $0x58] sm:$0xff]
  %v39 = vld [vmem:[%s1 + $0x60] sm:$0xff]
  %v40 = vld [vmem:[%s1 + $0x68] sm:$0xff]
  %v41 = vld [vmem:[%s1 + $0x70] sm:$0xff]
  %v42 = vld [vmem:[%s1 + $0x78] sm:$0xff]
  %43 = vmatprep.subr.mxu0 0.0
  %44 = vmatpush1.msra.mxu0 %v27
  %45 = vmatprep.subr.mxu0 0.0
  %46 = vmatpush1.msra.mxu0 %v28
  %47 = vmatprep.subr.mxu0 0.0
  %48 = vmatpush1.msra.mxu0 %v29
  %49 = vmatprep.subr.mxu0 0.0
  %50 = vmatpush1.msra.mxu0 %v30
  %51 = vmatprep.subr.mxu0 0.0
  %52 = vmatpush1.msra.mxu0 %v31
  %53 = vmatprep.subr.mxu0 0.0
  %54 = vmatpush1.msra.mxu0 %v32
  %55 = vmatprep.subr.mxu0 0.0
  %56 = vmatpush1.msra.mxu0 %v33
  %57 = vmatprep.subr.mxu0 0.0
  %58 = vmatpush1.msra.mxu0 %v34
  %59 = vmatprep.subr.mxu0 0.0
  %60 = vmatpush1.msra.mxu0 %v35
  %61 = vmatprep.subr.mxu0 0.0
  %62 = vmatpush1.msra.mxu0 %v36
  %63 = vmatprep.subr.mxu0 0.0
  %64 = vmatpush1.msra.mxu0 %v37
  %65 = vmatprep.subr.mxu0 0.0
  %66 = vmatpush1.msra.mxu0 %v38
  %67 = vmatprep.subr.mxu0 0.0
  %68 = vmatpush1.msra.mxu0 %v39
  %69 = vmatprep.subr.mxu0 0.0
  %70 = vmatpush1.msra.mxu0 %v40
  %71 = vmatprep.subr.mxu0 0.0
  %72 = vmatpush1.msra.mxu0 %v41
  %73 = vmatprep.subr.mxu0 0.0
  %74 = vmatpush1.msra.mxu0 %v42
  %75 = vmatprep.subr.mxu0 0.0
  %76 = vmatpush1.msra.mxu0 0.0
  %77 = vmatprep.subr.mxu0 0.0
  %78 = vmatpush1.msra.mxu0 0.0
  %79 = vmatprep.subr.mxu0 0.0
  %80 = vmatpush1.msra.mxu0 0.0
  %81 = vmatprep.subr.mxu0 0.0
  %82 = vmatpush1.msra.mxu0 0.0
  %83 = vmatprep.subr.mxu0 0.0
  %84 = vmatpush1.msra.mxu0 0.0
  %85 = vmatprep.subr.mxu0 0.0
  %86 = vmatpush1.msra.mxu0 0.0
  %87 = vmatprep.subr.mxu0 0.0
  %88 = vmatpush1.msra.mxu0 0.0
  %89 = vmatprep.subr.mxu0 0.0
  %90 = vmatpush1.msra.mxu0 0.0
  %91 = vmatprep.subr.mxu0 0.0
  %92 = vmatpush1.msra.mxu0 0.0
  %93 = vmatprep.subr.mxu0 0.0
  %94 = vmatpush1.msra.mxu0 0.0
  %95 = vmatprep.subr.mxu0 0.0
  %96 = vmatpush1.msra.mxu0 0.0
  %97 = vmatprep.subr.mxu0 0.0
  %98 = vmatpush1.msra.mxu0 0.0
  %99 = vmatprep.subr.mxu0 0.0
  %100 = vmatpush1.msra.mxu0 0.0
  %101 = vmatprep.subr.mxu0 0.0
  %102 = vmatpush1.msra.mxu0 0.0
  %103 = vmatprep.subr.mxu0 0.0
  %104 = vmatpush1.msra.mxu0 0.0
  %105 = vmatprep.subr.mxu0 0.0
  %106 = vmatpush1.msra.mxu0 0.0
  %107 = vmatprep.mubr.f32.mxu0 0.0
  %108 = vmatmul.mubr.f32.gmra.mrb[0].mxu0 %v11
  %v109 = vpop.f32.mrb[0].mxu0
  %v110 = vadd.f32 0.0, %v109
  %v111 = vpop.f32.mrb[0].mxu0
  %112 = vmatprep.mubr.f32.mxu0 0.0
  %113 = vmatmul.mubr.f32.gmra.mrb[0].mxu0 %v12
  %v114 = vpop.f32.mrb[0].mxu0
  %v115 = vadd.f32 0.0, %v114
  %v116 = vpop.f32.mrb[0].mxu0
  %117 = vmatprep.mubr.f32.mxu0 0.0
  %118 = vmatmul.mubr.f32.gmra.mrb[0].mxu0 %v13
  %v119 = vpop.f32.mrb[0].mxu0
  %v120 = vadd.f32 0.0, %v119
  %v121 = vpop.f32.mrb[0].mxu0
  %122 = vmatprep.mubr.f32.mxu0 0.0
  %123 = vmatmul.mubr.f32.gmra.mrb[0].mxu0 %v14
  %v124 = vpop.f32.mrb[0].mxu0
  %v125 = vadd.f32 0.0, %v124
  %v126 = vpop.f32.mrb[0].mxu0
  %127 = vmatprep.mubr.f32.mxu0 0.0
  %128 = vmatmul.mubr.f32.gmra.mrb[0].mxu0 %v15
  %v129 = vpop.f32.mrb[0].mxu0
  %v130 = vadd.f32 0.0, %v129
  %v131 = vpop.f32.mrb[0].mxu0
  %132 = vmatprep.mubr.f32.mxu0 0.0
  %133 = vmatmul.mubr.f32.gmra.mrb[0].mxu0 %v16
  %v134 = vpop.f32.mrb[0].mxu0
  %v135 = vadd.f32 0.0, %v134
  %v136 = vpop.f32.mrb[0].mxu0
  %137 = vmatprep.mubr.f32.mxu0 0.0
  %138 = vmatmul.mubr.f32.gmra.mrb[0].mxu0 %v17
  %v139 = vpop.f32.mrb[0].mxu0
  %v140 = vadd.f32 0.0, %v139
  %v141 = vpop.f32.mrb[0].mxu0
  %142 = vmatprep.mubr.f32.mxu0 0.0
  %143 = vmatmul.mubr.f32.gmra.mrb[0].mxu0 %v18
  %v144 = vpop.f32.mrb[0].mxu0
  %v145 = vadd.f32 0.0, %v144
  %v146 = vpop.f32.mrb[0].mxu0
  %147 = vmatprep.mubr.f32.mxu0 0.0
  %148 = vmatmul.mubr.f32.gmra.mrb[0].mxu0 %v19
  %v149 = vpop.f32.mrb[0].mxu0
  %v150 = vadd.f32 0.0, %v149
  %v151 = vpop.f32.mrb[0].mxu0
  %152 = vmatprep.mubr.f32.mxu0 0.0
  %153 = vmatmul.mubr.f32.gmra.mrb[0].mxu0 %v20
  %v154 = vpop.f32.mrb[0].mxu0
  %v155 = vadd.f32 0.0, %v154
  %v156 = vpop.f32.mrb[0].mxu0
  %157 = vmatprep.mubr.f32.mxu0 0.0
  %158 = vmatmul.mubr.f32.gmra.mrb[0].mxu0 %v21
  %v159 = vpop.f32.mrb[0].mxu0
  %v160 = vadd.f32 0.0, %v159
  %v161 = vpop.f32.mrb[0].mxu0
  %162 = vmatprep.mubr.f32.mxu0 0.0
  %163 = vmatmul.mubr.f32.gmra.mrb[0].mxu0 %v22
  %v164 = vpop.f32.mrb[0].mxu0
  %v165 = vadd.f32 0.0, %v164
  %v166 = vpop.f32.mrb[0].mxu0
  %167 = vmatprep.mubr.f32.mxu0 0.0
  %168 = vmatmul.mubr.f32.gmra.mrb[0].mxu0 %v23
  %v169 = vpop.f32.mrb[0].mxu0
  %v170 = vadd.f32 0.0, %v169
  %v171 = vpop.f32.mrb[0].mxu0
  %172 = vmatprep.mubr.f32.mxu0 0.0
  %173 = vmatmul.mubr.f32.gmra.mrb[0].mxu0 %v24
  %v174 = vpop.f32.mrb[0].mxu0
  %v175 = vadd.f32 0.0, %v174
  %v176 = vpop.f32.mrb[0].mxu0
  %177 = vmatprep.mubr.f32.mxu0 0.0
  %178 = vmatmul.mubr.f32.gmra.mrb[0].mxu0 %v25
  %v179 = vpop.f32.mrb[0].mxu0
  %v180 = vadd.f32 0.0, %v179
  %v181 = vpop.f32.mrb[0].mxu0
  %182 = vmatprep.mubr.f32.mxu0 0.0
  %183 = vmatmul.mubr.f32.gmra.mrb[0].mxu0 %v26
  %v184 = vpop.f32.mrb[0].mxu0
  %v185 = vadd.f32 0.0, %v184
  %v186 = vpop.f32.mrb[0].mxu0
  %187 = vdwg.mxu0
  %v188 = vpack.c.bf16 %v115, %v110
  %v189 = vpack.c.bf16 %v125, %v120
  %v190 = vpack.c.bf16 %v135, %v130
  %v191 = vpack.c.bf16 %v145, %v140
  %v192 = vpack.c.bf16 %v155, %v150
  %v193 = vpack.c.bf16 %v165, %v160
  %v194 = vpack.c.bf16 %v175, %v170
  %v195 = vpack.c.bf16 %v185, %v180
  %v204 = vunpack.c.l.b16 %v188
  %v205 = vunpack.c.h.b16 %v188
  %v206 = vunpack.c.l.b16 %v189
  %v207 = vunpack.c.h.b16 %v189
  %v208 = vunpack.c.l.b16 %v190
  %v209 = vunpack.c.h.b16 %v190
  %v210 = vunpack.c.l.b16 %v191
  %v211 = vunpack.c.h.b16 %v191
  %v212 = vunpack.c.l.b16 %v192
  %v213 = vunpack.c.h.b16 %v192
  %v214 = vunpack.c.l.b16 %v193
  %v215 = vunpack.c.h.b16 %v193
  %v216 = vunpack.c.l.b16 %v194
  %v217 = vunpack.c.h.b16 %v194
  %v218 = vunpack.c.l.b16 %v195
  %v219 = vunpack.c.h.b16 %v195
  %v220 = vpack.c.b16 %v204, %v204
  %v221 = vpack.c.b16 %v205, %v205
  %v222 = vpack.c.b16 %v206, %v206
  %v223 = vpack.c.b16 %v207, %v207
  %v224 = vpack.c.b16 %v208, %v208
  %v225 = vpack.c.b16 %v209, %v209
  %v226 = vpack.c.b16 %v210, %v210
  %v227 = vpack.c.b16 %v211, %v211
  %v228 = vpack.c.b16 %v212, %v212
  %v229 = vpack.c.b16 %v213, %v213
  %v230 = vpack.c.b16 %v214, %v214
  %v231 = vpack.c.b16 %v215, %v215
  %v232 = vpack.c.b16 %v216, %v216
  %v233 = vpack.c.b16 %v217, %v217
  %v234 = vpack.c.b16 %v218, %v218
  %v235 = vpack.c.b16 %v219, %v219
  %252 = vst [vmem:[%s2] sm:$0xf] %v220
  %253 = vst [vmem:[%s2 + $0x4] sm:$0xf] %v221
  %254 = vst [vmem:[%s2 + $0x8] sm:$0xf] %v222
  %255 = vst [vmem:[%s2 + $0xc] sm:$0xf] %v223
  %256 = vst [vmem:[%s2 + $0x10] sm:$0xf] %v224
  %257 = vst [vmem:[%s2 + $0x14] sm:$0xf] %v225
  %258 = vst [vmem:[%s2 + $0x18] sm:$0xf] %v226
  %259 = vst [vmem:[%s2 + $0x1c] sm:$0xf] %v227
  %260 = vst [vmem:[%s2 + $0x20] sm:$0xf] %v228
  %261 = vst [vmem:[%s2 + $0x24] sm:$0xf] %v229
  %262 = vst [vmem:[%s2 + $0x28] sm:$0xf] %v230
  %263 = vst [vmem:[%s2 + $0x2c] sm:$0xf] %v231
  %264 = vst [vmem:[%s2 + $0x30] sm:$0xf] %v232
  %265 = vst [vmem:[%s2 + $0x34] sm:$0xf] %v233
  %266 = vst [vmem:[%s2 + $0x38] sm:$0xf] %v234
  %267 = vst [vmem:[%s2 + $0x3c] sm:$0xf] %v235
  // Predicated region
  $region10: #{gcn_forward.7} parent=0 // pred_check
    _
  $region11: #{gcn_forward.7} parent=0 // pred_check_branch
    %269 = sbr.rel (0) target = $region13
  $region12: #{gcn_forward.7} parent=0 // pred_region
    _
  $region13: #{gcn_forward.7} parent=0 // pred_fallthru
    _
  // Predicated region
  $region14: #{gcn_forward.7} parent=0 // pred_check
    _
  $region15: #{gcn_forward.7} parent=0 // pred_check_branch
    %271 = sbr.rel (0) target = $region17
  $region16: #{gcn_forward.7} parent=0 // pred_region
    _
  $region17: #{gcn_forward.7} parent=0 // pred_fallthru
    _

// kernel: gcn_forward.9
$region0: #{gcn_forward.9}
  #allocation0 [shape = 'u32[]', space=smem, size = 0x4, offset = 0x4, fixed_abs, tag = 'smem constant byte address 0x4 - core index']
  #allocation1 [shape = 'u32[144,128]{1,0:T(1,128)}', space=vmem, size = 0x12000, scoped, tag = 'internal scratch']
  %s0 = inlined_call_operand.vmem [shape: f32[128,128], index: 0, kind: input, shape index: {}]
  %s1 = inlined_call_operand.vmem [shape: f32[1,128], index: 1, kind: input, shape index: {}]
  %s2 = inlined_call_operand.vmem [shape: f32[1,128], index: 2, kind: input, shape index: {}]
  %s3 = inlined_call_operand.vmem [shape: f32[1,128], index: 3, kind: input, shape index: {}]
  %s4 = inlined_call_operand.vmem [shape: f32[1,128], index: 4, kind: input, shape index: {}]
  %s5 = inlined_call_operand.vmem [shape: f32[128,128], index: 5, kind: input, shape index: {}, may-alias: {5,7}]
  %s6 = inlined_call_operand.vmem [shape: f32[128,128], index: 6, kind: output, shape index: {0}]
  %s7 = inlined_call_operand.vmem [shape: f32[128,128], index: 7, kind: output, shape index: {1}, may-alias: {5,7}]
  %8 = xla_tuple %s6, %s7
  %s9 = sld [smem:[#allocation0]]
  $region42: #{gcn_forward.9} parent=0
    _
  %s11 = ssub.s32 1, %s9
  %s12 = scalar_select 0, %s11, %s9
  // Predicated region
  $region2: #{gcn_forward.9} parent=0 // pred_check
    _
  $region3: #{gcn_forward.9} parent=0 // pred_check_branch
    %14 = sbr.rel (0) target = $region5
  $region4: #{gcn_forward.9} parent=0 // pred_region
    _
  $region5: #{gcn_forward.9} parent=0 // pred_fallthru
    _
  // Predicated region
  $region6: #{gcn_forward.9} parent=0 // pred_check
    _
  $region7: #{gcn_forward.9} parent=0 // pred_check_branch
    %16 = sbr.rel (0) target = $region9
  $region8: #{gcn_forward.9} parent=0 // pred_region
    _
  $region9: #{gcn_forward.9} parent=0 // pred_fallthru
    _
  // Predicated region
  $region10: #{gcn_forward.9} parent=0 // pred_check
    _
  $region11: #{gcn_forward.9} parent=0 // pred_check_branch
    %18 = sbr.rel (0) target = $region13
  $region12: #{gcn_forward.9} parent=0 // pred_region
    _
  $region13: #{gcn_forward.9} parent=0 // pred_fallthru
    _
  // Predicated region
  $region14: #{gcn_forward.9} parent=0 // pred_check
    _
  $region15: #{gcn_forward.9} parent=0 // pred_check_branch
    %20 = sbr.rel (0) target = $region17
  $region16: #{gcn_forward.9} parent=0 // pred_region
    _
  $region17: #{gcn_forward.9} parent=0 // pred_fallthru
    _
  // Predicated region
  $region18: #{gcn_forward.9} parent=0 // pred_check
    _
  $region19: #{gcn_forward.9} parent=0 // pred_check_branch
    %22 = sbr.rel (0) target = $region21
  $region20: #{gcn_forward.9} parent=0 // pred_region
    _
  $region21: #{gcn_forward.9} parent=0 // pred_fallthru
    _
  // Predicated region
  $region22: #{gcn_forward.9} parent=0 // pred_check
    _
  $region23: #{gcn_forward.9} parent=0 // pred_check_branch
    %24 = sbr.rel (0) target = $region25
  $region24: #{gcn_forward.9} parent=0 // pred_region
    _
  $region25: #{gcn_forward.9} parent=0 // pred_fallthru
    _
  %v25 = vld [vmem:[%s0] sm:$0xff]
  %v26 = vld [vmem:[%s0 + $0x8] sm:$0xff]
  %v27 = vld [vmem:[%s0 + $0x10] sm:$0xff]
  %v28 = vld [vmem:[%s0 + $0x18] sm:$0xff]
  %v29 = vld [vmem:[%s0 + $0x20] sm:$0xff]
  %v30 = vld [vmem:[%s0 + $0x28] sm:$0xff]
  %v31 = vld [vmem:[%s0 + $0x30] sm:$0xff]
  %v32 = vld [vmem:[%s0 + $0x38] sm:$0xff]
  %v33 = vld [vmem:[%s0 + $0x40] sm:$0xff]
  %v34 = vld [vmem:[%s0 + $0x48] sm:$0xff]
  %v35 = vld [vmem:[%s0 + $0x50] sm:$0xff]
  %v36 = vld [vmem:[%s0 + $0x58] sm:$0xff]
  %v37 = vld [vmem:[%s0 + $0x60] sm:$0xff]
  %v38 = vld [vmem:[%s0 + $0x68] sm:$0xff]
  %v39 = vld [vmem:[%s0 + $0x70] sm:$0xff]
  %v40 = vld [vmem:[%s0 + $0x78] sm:$0xff]
  %v41 = vld [vmem:[%s1] sm:$0x1]
  %v43 = vlaneseq
  %v44 = vshrl.u32 %v43, 7
  %v45 = vsub.s32 0, %v44
  %v46 = vrot.slane %v41, %v45
  %v48 = vsub.f32 %v25, %v46
  %v49 = vsub.f32 %v26, %v46
  %v50 = vsub.f32 %v27, %v46
  %v51 = vsub.f32 %v28, %v46
  %v52 = vsub.f32 %v29, %v46
  %v53 = vsub.f32 %v30, %v46
  %v54 = vsub.f32 %v31, %v46
  %v55 = vsub.f32 %v32, %v46
  %v56 = vsub.f32 %v33, %v46
  %v57 = vsub.f32 %v34, %v46
  %v58 = vsub.f32 %v35, %v46
  %v59 = vsub.f32 %v36, %v46
  %v60 = vsub.f32 %v37, %v46
  %v61 = vsub.f32 %v38, %v46
  %v62 = vsub.f32 %v39, %v46
  %v63 = vsub.f32 %v40, %v46
  %v64 = vld [vmem:[%s2] sm:$0x1]
  %v66 = vlaneseq
  %v67 = vshrl.u32 %v66, 7
  %v68 = vsub.s32 0, %v67
  %v69 = vrot.slane %v64, %v68
  %v71 = vmul.f32 %v48, %v69
  %v72 = vmul.f32 %v49, %v69
  %v73 = vmul.f32 %v50, %v69
  %v74 = vmul.f32 %v51, %v69
  %v75 = vmul.f32 %v52, %v69
  %v76 = vmul.f32 %v53, %v69
  %v77 = vmul.f32 %v54, %v69
  %v78 = vmul.f32 %v55, %v69
  %v79 = vmul.f32 %v56, %v69
  %v80 = vmul.f32 %v57, %v69
  %v81 = vmul.f32 %v58, %v69
  %v82 = vmul.f32 %v59, %v69
  %v83 = vmul.f32 %v60, %v69
  %v84 = vmul.f32 %v61, %v69
  %v85 = vmul.f32 %v62, %v69
  %v86 = vmul.f32 %v63, %v69
  %v87 = vld [vmem:[%s3] sm:$0x1]
  %v89 = vlaneseq
  %v90 = vshrl.u32 %v89, 7
  %v91 = vsub.s32 0, %v90
  %v92 = vrot.slane %v87, %v91
  %v94 = vmul.f32 %v71, %v92
  %v95 = vmul.f32 %v72, %v92
  %v96 = vmul.f32 %v73, %v92
  %v97 = vmul.f32 %v74, %v92
  %v98 = vmul.f32 %v75, %v92
  %v99 = vmul.f32 %v76, %v92
  %v100 = vmul.f32 %v77, %v92
  %v101 = vmul.f32 %v78, %v92
  %v102 = vmul.f32 %v79, %v92
  %v103 = vmul.f32 %v80, %v92
  %v104 = vmul.f32 %v81, %v92
  %v105 = vmul.f32 %v82, %v92
  %v106 = vmul.f32 %v83, %v92
  %v107 = vmul.f32 %v84, %v92
  %v108 = vmul.f32 %v85, %v92
  %v109 = vmul.f32 %v86, %v92
  %v110 = vld [vmem:[%s4] sm:$0x1]
  %v112 = vlaneseq
  %v113 = vshrl.u32 %v112, 7
  %v114 = vsub.s32 0, %v113
  %v115 = vrot.slane %v110, %v114
  %v117 = vadd.f32 %v94, %v115
  %v118 = vadd.f32 %v95, %v115
  %v119 = vadd.f32 %v96, %v115
  %v120 = vadd.f32 %v97, %v115
  %v121 = vadd.f32 %v98, %v115
  %v122 = vadd.f32 %v99, %v115
  %v123 = vadd.f32 %v100, %v115
  %v124 = vadd.f32 %v101, %v115
  %v125 = vadd.f32 %v102, %v115
  %v126 = vadd.f32 %v103, %v115
  %v127 = vadd.f32 %v104, %v115
  %v128 = vadd.f32 %v105, %v115
  %v129 = vadd.f32 %v106, %v115
  %v130 = vadd.f32 %v107, %v115
  %v131 = vadd.f32 %v108, %v115
  %v132 = vadd.f32 %v109, %v115
  %v133 = vmax.f32 %v117, 0.0
  %v134 = vmax.f32 %v118, 0.0
  %v135 = vmax.f32 %v119, 0.0
  %v136 = vmax.f32 %v120, 0.0
  %v137 = vmax.f32 %v121, 0.0
  %v138 = vmax.f32 %v122, 0.0
  %v139 = vmax.f32 %v123, 0.0
  %v140 = vmax.f32 %v124, 0.0
  %v141 = vmax.f32 %v125, 0.0
  %v142 = vmax.f32 %v126, 0.0
  %v143 = vmax.f32 %v127, 0.0
  %v144 = vmax.f32 %v128, 0.0
  %v145 = vmax.f32 %v129, 0.0
  %v146 = vmax.f32 %v130, 0.0
  %v147 = vmax.f32 %v131, 0.0
  %v148 = vmax.f32 %v132, 0.0
  %149 = vst [vmem:[%s6] sm:$0xff] %v133
  %150 = vst [vmem:[%s6 + $0x8] sm:$0xff] %v134
  %151 = vst [vmem:[%s6 + $0x10] sm:$0xff] %v135
  %152 = vst [vmem:[%s6 + $0x18] sm:$0xff] %v136
  %153 = vst [vmem:[%s6 + $0x20] sm:$0xff] %v137
  %154 = vst [vmem:[%s6 + $0x28] sm:$0xff] %v138
  %155 = vst [vmem:[%s6 + $0x30] sm:$0xff] %v139
  %156 = vst [vmem:[%s6 + $0x38] sm:$0xff] %v140
  %157 = vst [vmem:[%s6 + $0x40] sm:$0xff] %v141
  %158 = vst [vmem:[%s6 + $0x48] sm:$0xff] %v142
  %159 = vst [vmem:[%s6 + $0x50] sm:$0xff] %v143
  %160 = vst [vmem:[%s6 + $0x58] sm:$0xff] %v144
  %161 = vst [vmem:[%s6 + $0x60] sm:$0xff] %v145
  %162 = vst [vmem:[%s6 + $0x68] sm:$0xff] %v146
  %163 = vst [vmem:[%s6 + $0x70] sm:$0xff] %v147
  %164 = vst [vmem:[%s6 + $0x78] sm:$0xff] %v148
  %v165 = vld [vmem:[%s5] sm:$0xff]
  %v166 = vld [vmem:[%s5 + $0x8] sm:$0xff]
  %v167 = vld [vmem:[%s5 + $0x10] sm:$0xff]
  %v168 = vld [vmem:[%s5 + $0x18] sm:$0xff]
  %v169 = vld [vmem:[%s5 + $0x20] sm:$0xff]
  %v170 = vld [vmem:[%s5 + $0x28] sm:$0xff]
  %v171 = vld [vmem:[%s5 + $0x30] sm:$0xff]
  %v172 = vld [vmem:[%s5 + $0x38] sm:$0xff]
  %v173 = vld [vmem:[%s5 + $0x40] sm:$0xff]
  %v174 = vld [vmem:[%s5 + $0x48] sm:$0xff]
  %v175 = vld [vmem:[%s5 + $0x50] sm:$0xff]
  %v176 = vld [vmem:[%s5 + $0x58] sm:$0xff]
  %v177 = vld [vmem:[%s5 + $0x60] sm:$0xff]
  %v178 = vld [vmem:[%s5 + $0x68] sm:$0xff]
  %v179 = vld [vmem:[%s5 + $0x70] sm:$0xff]
  %v180 = vld [vmem:[%s5 + $0x78] sm:$0xff]
  %v181 = vadd.f32 %v165, %v133
  %v182 = vadd.f32 %v166, %v134
  %v183 = vadd.f32 %v167, %v135
  %v184 = vadd.f32 %v168, %v136
  %v185 = vadd.f32 %v169, %v137
  %v186 = vadd.f32 %v170, %v138
  %v187 = vadd.f32 %v171, %v139
  %v188 = vadd.f32 %v172, %v140
  %v189 = vadd.f32 %v173, %v141
  %v190 = vadd.f32 %v174, %v142
  %v191 = vadd.f32 %v175, %v143
  %v192 = vadd.f32 %v176, %v144
  %v193 = vadd.f32 %v177, %v145
  %v194 = vadd.f32 %v178, %v146
  %v195 = vadd.f32 %v179, %v147
  %v196 = vadd.f32 %v180, %v148
  %197 = vst [vmem:[%s7] sm:$0xff] %v181
  %198 = vst [vmem:[%s7 + $0x8] sm:$0xff] %v182
  %199 = vst [vmem:[%s7 + $0x10] sm:$0xff] %v183
  %200 = vst [vmem:[%s7 + $0x18] sm:$0xff] %v184
  %201 = vst [vmem:[%s7 + $0x20] sm:$0xff] %v185
  %202 = vst [vmem:[%s7 + $0x28] sm:$0xff] %v186
  %203 = vst [vmem:[%s7 + $0x30] sm:$0xff] %v187
  %204 = vst [vmem:[%s7 + $0x38] sm:$0xff] %v188
  %205 = vst [vmem:[%s7 + $0x40] sm:$0xff] %v189
  %206 = vst [vmem:[%s7 + $0x48] sm:$0xff] %v190
  %207 = vst [vmem:[%s7 + $0x50] sm:$0xff] %v191
  %208 = vst [vmem:[%s7 + $0x58] sm:$0xff] %v192
  %209 = vst [vmem:[%s7 + $0x60] sm:$0xff] %v193
  %210 = vst [vmem:[%s7 + $0x68] sm:$0xff] %v194
  %211 = vst [vmem:[%s7 + $0x70] sm:$0xff] %v195
  %212 = vst [vmem:[%s7 + $0x78] sm:$0xff] %v196
  // Predicated region
  $region26: #{gcn_forward.9} parent=0 // pred_check
    _
  $region27: #{gcn_forward.9} parent=0 // pred_check_branch
    %214 = sbr.rel (0) target = $region29
  $region28: #{gcn_forward.9} parent=0 // pred_region
    _
  $region29: #{gcn_forward.9} parent=0 // pred_fallthru
    _
  // Predicated region
  $region30: #{gcn_forward.9} parent=0 // pred_check
    _
  $region31: #{gcn_forward.9} parent=0 // pred_check_branch
    %216 = sbr.rel (0) target = $region33
  $region32: #{gcn_forward.9} parent=0 // pred_region
    _
  $region33: #{gcn_forward.9} parent=0 // pred_fallthru
    _
  // Predicated region
  $region34: #{gcn_forward.9} parent=0 // pred_check
    _
  $region35: #{gcn_forward.9} parent=0 // pred_check_branch
    %218 = sbr.rel (0) target = $region37
  $region36: #{gcn_forward.9} parent=0 // pred_region
    _
  $region37: #{gcn_forward.9} parent=0 // pred_fallthru
    _
  // Predicated region
  $region38: #{gcn_forward.9} parent=0 // pred_check
    _
  $region39: #{gcn_forward.9} parent=0 // pred_check_branch
    %220 = sbr.rel (0) target = $region41
  $region40: #{gcn_forward.9} parent=0 // pred_region
    _
  $region41: #{gcn_forward.9} parent=0 // pred_fallthru
    _

// kernel: gcn_forward.8
$region0: #{gcn_forward.8}
  #allocation0 [shape = 'u32[]', space=smem, size = 0x4, offset = 0x4, fixed_abs, tag = 'smem constant byte address 0x4 - core index']
  #allocation1 [shape = 'u32[144,128]{1,0:T(1,128)}', space=vmem, size = 0x12000, scoped, tag = 'internal scratch']
  #allocation2 [shape = 'f32[128,128]{1,0:T(8,128)}', space=vmem, size = 0x10000, scoped, tag = 'scratch operand']
  %s0 = inlined_call_operand.vmem [shape: bf16[128,128], index: 0, kind: input, shape index: {}]
  %s1 = inlined_call_operand.vmem [shape: bf16[128,128], index: 1, kind: input, shape index: {}]
  %s2 = inlined_call_operand.vmem [shape: f32[1,128], index: 2, kind: input, shape index: {}]
  %s3 = inlined_call_operand.vmem [shape: f32[128,128], index: 3, kind: output, shape index: {0}]
  %s4 = inlined_call_operand.vmem [shape: f32[1,128], index: 4, kind: output, shape index: {1}]
  %s5 = inlined_call_operand.vmem [shape: f32[1,128], index: 5, kind: output, shape index: {2}]
  %6 = xla_tuple %s3, %s4, %s5
  %s7 = sld [smem:[#allocation0]]
  $region54: #{gcn_forward.8} parent=0
    _
  %s9 = ssub.s32 1, %s7
  %s10 = scalar_select 0, %s9, %s7
  // Predicated region
  $region2: #{gcn_forward.8} parent=0 // pred_check
    _
  $region3: #{gcn_forward.8} parent=0 // pred_check_branch
    %12 = sbr.rel (0) target = $region5
  $region4: #{gcn_forward.8} parent=0 // pred_region
    _
  $region5: #{gcn_forward.8} parent=0 // pred_fallthru
    _
  // Predicated region
  $region6: #{gcn_forward.8} parent=0 // pred_check
    _
  $region7: #{gcn_forward.8} parent=0 // pred_check_branch
    %14 = sbr.rel (0) target = $region9
  $region8: #{gcn_forward.8} parent=0 // pred_region
    _
  $region9: #{gcn_forward.8} parent=0 // pred_fallthru
    _
  // Predicated region
  $region10: #{gcn_forward.8} parent=0 // pred_check
    _
  $region11: #{gcn_forward.8} parent=0 // pred_check_branch
    %16 = sbr.rel (0) target = $region13
  $region12: #{gcn_forward.8} parent=0 // pred_region
    _
  $region13: #{gcn_forward.8} parent=0 // pred_fallthru
    _
  %p18 = scmp.eq.s32.totalorder 0, 0
  %p19 = scmp.eq.s32.totalorder 0, 0
  %p20 = pnand %p19, %p18
  %p21 = pneg %p20
  // Predicated region
  $region14: #{gcn_forward.8} parent=0 // pred_check
    _
  $region15: #{gcn_forward.8} parent=0 // pred_check_branch
    %23 = sbr.rel (%p20) target = $region17
  $region16: #{gcn_forward.8} parent=0 // pred_region
    %24 = vst [vmem:[%s4] sm:$0x1] 0.0
    %25 = vst [vmem:[%s5] sm:$0x1] 0.0
  $region17: #{gcn_forward.8} parent=0 // pred_fallthru
    _
  // Predicated region
  $region18: #{gcn_forward.8} parent=0 // pred_check
    %p26 = pneg %p18
  $region19: #{gcn_forward.8} parent=0 // pred_check_branch
    %28 = sbr.rel (%p26) target = $region21
  $region20: #{gcn_forward.8} parent=0 // pred_region
    %29 = vst [vmem:[#allocation2] sm:$0xff] 0.0
    %30 = vst [vmem:[#allocation2 + $0x8] sm:$0xff] 0.0
    %31 = vst [vmem:[#allocation2 + $0x10] sm:$0xff] 0.0
    %32 = vst [vmem:[#allocation2 + $0x18] sm:$0xff] 0.0
    %33 = vst [vmem:[#allocation2 + $0x20] sm:$0xff] 0.0
    %34 = vst [vmem:[#allocation2 + $0x28] sm:$0xff] 0.0
    %35 = vst [vmem:[#allocation2 + $0x30] sm:$0xff] 0.0
    %36 = vst [vmem:[#allocation2 + $0x38] sm:$0xff] 0.0
    %37 = vst [vmem:[#allocation2 + $0x40] sm:$0xff] 0.0
    %38 = vst [vmem:[#allocation2 + $0x48] sm:$0xff] 0.0
    %39 = vst [vmem:[#allocation2 + $0x50] sm:$0xff] 0.0
    %40 = vst [vmem:[#allocation2 + $0x58] sm:$0xff] 0.0
    %41 = vst [vmem:[#allocation2 + $0x60] sm:$0xff] 0.0
    %42 = vst [vmem:[#allocation2 + $0x68] sm:$0xff] 0.0
    %43 = vst [vmem:[#allocation2 + $0x70] sm:$0xff] 0.0
    %44 = vst [vmem:[#allocation2 + $0x78] sm:$0xff] 0.0
  $region21: #{gcn_forward.8} parent=0 // pred_fallthru
    _
  %v45 = vld [vmem:[#allocation2] sm:$0xff]
  %v46 = vld [vmem:[#allocation2 + $0x8] sm:$0xff]
  %v47 = vld [vmem:[#allocation2 + $0x10] sm:$0xff]
  %v48 = vld [vmem:[#allocation2 + $0x18] sm:$0xff]
  %v49 = vld [vmem:[#allocation2 + $0x20] sm:$0xff]
  %v50 = vld [vmem:[#allocation2 + $0x28] sm:$0xff]
  %v51 = vld [vmem:[#allocation2 + $0x30] sm:$0xff]
  %v52 = vld [vmem:[#allocation2 + $0x38] sm:$0xff]
  %v53 = vld [vmem:[#allocation2 + $0x40] sm:$0xff]
  %v54 = vld [vmem:[#allocation2 + $0x48] sm:$0xff]
  %v55 = vld [vmem:[#allocation2 + $0x50] sm:$0xff]
  %v56 = vld [vmem:[#allocation2 + $0x58] sm:$0xff]
  %v57 = vld [vmem:[#allocation2 + $0x60] sm:$0xff]
  %v58 = vld [vmem:[#allocation2 + $0x68] sm:$0xff]
  %v59 = vld [vmem:[#allocation2 + $0x70] sm:$0xff]
  %v60 = vld [vmem:[#allocation2 + $0x78] sm:$0xff]
  %v61 = vld [vmem:[%s0] sm:$0xf]
  %v62 = vld [vmem:[%s0 + $0x4] sm:$0xf]
  %v63 = vld [vmem:[%s0 + $0x8] sm:$0xf]
  %v64 = vld [vmem:[%s0 + $0xc] sm:$0xf]
  %v65 = vld [vmem:[%s0 + $0x10] sm:$0xf]
  %v66 = vld [vmem:[%s0 + $0x14] sm:$0xf]
  %v67 = vld [vmem:[%s0 + $0x18] sm:$0xf]
  %v68 = vld [vmem:[%s0 + $0x1c] sm:$0xf]
  %v69 = vld [vmem:[%s0 + $0x20] sm:$0xf]
  %v70 = vld [vmem:[%s0 + $0x24] sm:$0xf]
  %v71 = vld [vmem:[%s0 + $0x28] sm:$0xf]
  %v72 = vld [vmem:[%s0 + $0x2c] sm:$0xf]
  %v73 = vld [vmem:[%s0 + $0x30] sm:$0xf]
  %v74 = vld [vmem:[%s0 + $0x34] sm:$0xf]
  %v75 = vld [vmem:[%s0 + $0x38] sm:$0xf]
  %v76 = vld [vmem:[%s0 + $0x3c] sm:$0xf]
  %v77 = vld [vmem:[%s1] sm:$0xf]
  %v78 = vld [vmem:[%s1 + $0x4] sm:$0xf]
  %v79 = vld [vmem:[%s1 + $0x8] sm:$0xf]
  %v80 = vld [vmem:[%s1 + $0xc] sm:$0xf]
  %v81 = vld [vmem:[%s1 + $0x10] sm:$0xf]
  %v82 = vld [vmem:[%s1 + $0x14] sm:$0xf]
  %v83 = vld [vmem:[%s1 + $0x18] sm:$0xf]
  %v84 = vld [vmem:[%s1 + $0x1c] sm:$0xf]
  %v85 = vld [vmem:[%s1 + $0x20] sm:$0xf]
  %v86 = vld [vmem:[%s1 + $0x24] sm:$0xf]
  %v87 = vld [vmem:[%s1 + $0x28] sm:$0xf]
  %v88 = vld [vmem:[%s1 + $0x2c] sm:$0xf]
  %v89 = vld [vmem:[%s1 + $0x30] sm:$0xf]
  %v90 = vld [vmem:[%s1 + $0x34] sm:$0xf]
  %v91 = vld [vmem:[%s1 + $0x38] sm:$0xf]
  %v92 = vld [vmem:[%s1 + $0x3c] sm:$0xf]
  %v109 = vunpack.c.l.b16 %v61
  %v110 = vunpack.c.l.b16 %v62
  %v111 = vunpack.c.l.b16 %v63
  %v112 = vunpack.c.l.b16 %v64
  %v113 = vunpack.c.l.b16 %v65
  %v114 = vunpack.c.l.b16 %v66
  %v115 = vunpack.c.l.b16 %v67
  %v116 = vunpack.c.l.b16 %v68
  %v117 = vunpack.c.l.b16 %v69
  %v118 = vunpack.c.l.b16 %v70
  %v119 = vunpack.c.l.b16 %v71
  %v120 = vunpack.c.l.b16 %v72
  %v121 = vunpack.c.l.b16 %v73
  %v122 = vunpack.c.l.b16 %v74
  %v123 = vunpack.c.l.b16 %v75
  %v124 = vunpack.c.l.b16 %v76
  %v125 = vpack.c.b16 %v110, %v109
  %v126 = vpack.c.b16 %v112, %v111
  %v127 = vpack.c.b16 %v114, %v113
  %v128 = vpack.c.b16 %v116, %v115
  %v129 = vpack.c.b16 %v118, %v117
  %v130 = vpack.c.b16 %v120, %v119
  %v131 = vpack.c.b16 %v122, %v121
  %v132 = vpack.c.b16 %v124, %v123
  %v157 = vunpack.c.l.b16 %v77
  %v158 = vunpack.c.l.b16 %v78
  %v159 = vunpack.c.l.b16 %v79
  %v160 = vunpack.c.l.b16 %v80
  %v161 = vunpack.c.l.b16 %v81
  %v162 = vunpack.c.l.b16 %v82
  %v163 = vunpack.c.l.b16 %v83
  %v164 = vunpack.c.l.b16 %v84
  %v165 = vunpack.c.l.b16 %v85
  %v166 = vunpack.c.l.b16 %v86
  %v167 = vunpack.c.l.b16 %v87
  %v168 = vunpack.c.l.b16 %v88
  %v169 = vunpack.c.l.b16 %v89
  %v170 = vunpack.c.l.b16 %v90
  %v171 = vunpack.c.l.b16 %v91
  %v172 = vunpack.c.l.b16 %v92
  %v173 = vpack.c.b16 %v158, %v157
  %v174 = vpack.c.b16 %v160, %v159
  %v175 = vpack.c.b16 %v162, %v161
  %v176 = vpack.c.b16 %v164, %v163
  %v177 = vpack.c.b16 %v166, %v165
  %v178 = vpack.c.b16 %v168, %v167
  %v179 = vpack.c.b16 %v170, %v169
  %v180 = vpack.c.b16 %v172, %v171
  %189 = vmatprep.subr.bf16.mxu0 0
  %190 = vmatpush1.bf16.msra.mxu0 %v173
  %191 = vmatprep.subr.bf16.mxu0 0
  %192 = vmatpush1.bf16.msra.mxu0 %v174
  %193 = vmatprep.subr.bf16.mxu0 0
  %194 = vmatpush1.bf16.msra.mxu0 %v175
  %195 = vmatprep.subr.bf16.mxu0 0
  %196 = vmatpush1.bf16.msra.mxu0 %v176
  %197 = vmatprep.subr.bf16.mxu0 0
  %198 = vmatpush1.bf16.msra.mxu0 %v177
  %199 = vmatprep.subr.bf16.mxu0 0
  %200 = vmatpush1.bf16.msra.mxu0 %v178
  %201 = vmatprep.subr.bf16.mxu0 0
  %202 = vmatpush1.bf16.msra.mxu0 %v179
  %203 = vmatprep.subr.bf16.mxu0 0
  %204 = vmatpush1.bf16.msra.mxu0 %v180
  %205 = vmatprep.subr.bf16.mxu0 0
  %206 = vmatpush1.bf16.msra.mxu0 0
  %207 = vmatprep.subr.bf16.mxu0 0
  %208 = vmatpush1.bf16.msra.mxu0 0
  %209 = vmatprep.subr.bf16.mxu0 0
  %210 = vmatpush1.bf16.msra.mxu0 0
  %211 = vmatprep.subr.bf16.mxu0 0
  %212 = vmatpush1.bf16.msra.mxu0 0
  %213 = vmatprep.subr.bf16.mxu0 0
  %214 = vmatpush1.bf16.msra.mxu0 0
  %215 = vmatprep.subr.bf16.mxu0 0
  %216 = vmatpush1.bf16.msra.mxu0 0
  %217 = vmatprep.subr.bf16.mxu0 0
  %218 = vmatpush1.bf16.msra.mxu0 0
  %219 = vmatprep.subr.bf16.mxu0 0
  %220 = vmatpush1.bf16.msra.mxu0 0
  %221 = vmatprep.mubr.bf16.mxu0 0
  %222 = vmatmul.mubr.bf16.gmra.mrb[0].mxu0 %v125
  %v223 = vpop.f32.mrb[0].mxu0
  %v224 = vadd.f32 0.0, %v223
  %v225 = vpop.f32.mrb[0].mxu0
  %v226 = vpop.f32.mrb[0].mxu0
  %v227 = vadd.f32 0.0, %v226
  %v228 = vpop.f32.mrb[0].mxu0
  %229 = vmatprep.mubr.bf16.mxu0 0
  %230 = vmatmul.mubr.bf16.gmra.mrb[0].mxu0 %v126
  %v231 = vpop.f32.mrb[0].mxu0
  %v232 = vadd.f32 0.0, %v231
  %v233 = vpop.f32.mrb[0].mxu0
  %v234 = vpop.f32.mrb[0].mxu0
  %v235 = vadd.f32 0.0, %v234
  %v236 = vpop.f32.mrb[0].mxu0
  %237 = vmatprep.mubr.bf16.mxu0 0
  %238 = vmatmul.mubr.bf16.gmra.mrb[0].mxu0 %v127
  %v239 = vpop.f32.mrb[0].mxu0
  %v240 = vadd.f32 0.0, %v239
  %v241 = vpop.f32.mrb[0].mxu0
  %v242 = vpop.f32.mrb[0].mxu0
  %v243 = vadd.f32 0.0, %v242
  %v244 = vpop.f32.mrb[0].mxu0
  %245 = vmatprep.mubr.bf16.mxu0 0
  %246 = vmatmul.mubr.bf16.gmra.mrb[0].mxu0 %v128
  %v247 = vpop.f32.mrb[0].mxu0
  %v248 = vadd.f32 0.0, %v247
  %v249 = vpop.f32.mrb[0].mxu0
  %v250 = vpop.f32.mrb[0].mxu0
  %v251 = vadd.f32 0.0, %v250
  %v252 = vpop.f32.mrb[0].mxu0
  %253 = vmatprep.mubr.bf16.mxu0 0
  %254 = vmatmul.mubr.bf16.gmra.mrb[0].mxu0 %v129
  %v255 = vpop.f32.mrb[0].mxu0
  %v256 = vadd.f32 0.0, %v255
  %v257 = vpop.f32.mrb[0].mxu0
  %v258 = vpop.f32.mrb[0].mxu0
  %v259 = vadd.f32 0.0, %v258
  %v260 = vpop.f32.mrb[0].mxu0
  %261 = vmatprep.mubr.bf16.mxu0 0
  %262 = vmatmul.mubr.bf16.gmra.mrb[0].mxu0 %v130
  %v263 = vpop.f32.mrb[0].mxu0
  %v264 = vadd.f32 0.0, %v263
  %v265 = vpop.f32.mrb[0].mxu0
  %v266 = vpop.f32.mrb[0].mxu0
  %v267 = vadd.f32 0.0, %v266
  %v268 = vpop.f32.mrb[0].mxu0
  %269 = vmatprep.mubr.bf16.mxu0 0
  %270 = vmatmul.mubr.bf16.gmra.mrb[0].mxu0 %v131
  %v271 = vpop.f32.mrb[0].mxu0
  %v272 = vadd.f32 0.0, %v271
  %v273 = vpop.f32.mrb[0].mxu0
  %v274 = vpop.f32.mrb[0].mxu0
  %v275 = vadd.f32 0.0, %v274
  %v276 = vpop.f32.mrb[0].mxu0
  %277 = vmatprep.mubr.bf16.mxu0 0
  %278 = vmatmul.mubr.bf16.gmra.mrb[0].mxu0 %v132
  %v279 = vpop.f32.mrb[0].mxu0
  %v280 = vadd.f32 0.0, %v279
  %v281 = vpop.f32.mrb[0].mxu0
  %v282 = vpop.f32.mrb[0].mxu0
  %v283 = vadd.f32 0.0, %v282
  %v284 = vpop.f32.mrb[0].mxu0
  %285 = vdwg.mxu0
  %v286 = vadd.f32 %v45, %v224
  %v287 = vadd.f32 %v46, %v227
  %v288 = vadd.f32 %v47, %v232
  %v289 = vadd.f32 %v48, %v235
  %v290 = vadd.f32 %v49, %v240
  %v291 = vadd.f32 %v50, %v243
  %v292 = vadd.f32 %v51, %v248
  %v293 = vadd.f32 %v52, %v251
  %v294 = vadd.f32 %v53, %v256
  %v295 = vadd.f32 %v54, %v259
  %v296 = vadd.f32 %v55, %v264
  %v297 = vadd.f32 %v56, %v267
  %v298 = vadd.f32 %v57, %v272
  %v299 = vadd.f32 %v58, %v275
  %v300 = vadd.f32 %v59, %v280
  %v301 = vadd.f32 %v60, %v283
  %302 = vst [vmem:[#allocation2] sm:$0xff] %v286
  %303 = vst [vmem:[#allocation2 + $0x8] sm:$0xff] %v287
  %304 = vst [vmem:[#allocation2 + $0x10] sm:$0xff] %v288
  %305 = vst [vmem:[#allocation2 + $0x18] sm:$0xff] %v289
  %306 = vst [vmem:[#allocation2 + $0x20] sm:$0xff] %v290
  %307 = vst [vmem:[#allocation2 + $0x28] sm:$0xff] %v291
  %308 = vst [vmem:[#allocation2 + $0x30] sm:$0xff] %v292
  %309 = vst [vmem:[#allocation2 + $0x38] sm:$0xff] %v293
  %310 = vst [vmem:[#allocation2 + $0x40] sm:$0xff] %v294
  %311 = vst [vmem:[#allocation2 + $0x48] sm:$0xff] %v295
  %312 = vst [vmem:[#allocation2 + $0x50] sm:$0xff] %v296
  %313 = vst [vmem:[#allocation2 + $0x58] sm:$0xff] %v297
  %314 = vst [vmem:[#allocation2 + $0x60] sm:$0xff] %v298
  %315 = vst [vmem:[#allocation2 + $0x68] sm:$0xff] %v299
  %316 = vst [vmem:[#allocation2 + $0x70] sm:$0xff] %v300
  %317 = vst [vmem:[#allocation2 + $0x78] sm:$0xff] %v301
  // Predicated region
  $region22: #{gcn_forward.8} parent=0 // pred_check
    %p318 = pneg %p18
  $region23: #{gcn_forward.8} parent=0 // pred_check_branch
    %320 = sbr.rel (%p318) target = $region25
  $region24: #{gcn_forward.8} parent=0 // pred_region
    %v321 = vld [vmem:[#allocation2] sm:$0xff]
    %v322 = vld [vmem:[#allocation2 + $0x8] sm:$0xff]
    %v323 = vld [vmem:[#allocation2 + $0x10] sm:$0xff]
    %v324 = vld [vmem:[#allocation2 + $0x18] sm:$0xff]
    %v325 = vld [vmem:[#allocation2 + $0x20] sm:$0xff]
    %v326 = vld [vmem:[#allocation2 + $0x28] sm:$0xff]
    %v327 = vld [vmem:[#allocation2 + $0x30] sm:$0xff]
    %v328 = vld [vmem:[#allocation2 + $0x38] sm:$0xff]
    %v329 = vld [vmem:[#allocation2 + $0x40] sm:$0xff]
    %v330 = vld [vmem:[#allocation2 + $0x48] sm:$0xff]
    %v331 = vld [vmem:[#allocation2 + $0x50] sm:$0xff]
    %v332 = vld [vmem:[#allocation2 + $0x58] sm:$0xff]
    %v333 = vld [vmem:[#allocation2 + $0x60] sm:$0xff]
    %v334 = vld [vmem:[#allocation2 + $0x68] sm:$0xff]
    %v335 = vld [vmem:[#allocation2 + $0x70] sm:$0xff]
    %v336 = vld [vmem:[#allocation2 + $0x78] sm:$0xff]
    %v337 = vld [vmem:[%s2] sm:$0x1]
    %v339 = vlaneseq
    %v340 = vshrl.u32 %v339, 7
    %v341 = vsub.s32 0, %v340
    %v342 = vrot.slane %v337, %v341
    %v344 = vadd.f32 %v321, %v342
    %v345 = vadd.f32 %v322, %v342
    %v346 = vadd.f32 %v323, %v342
    %v347 = vadd.f32 %v324, %v342
    %v348 = vadd.f32 %v325, %v342
    %v349 = vadd.f32 %v326, %v342
    %v350 = vadd.f32 %v327, %v342
    %v351 = vadd.f32 %v328, %v342
    %v352 = vadd.f32 %v329, %v342
    %v353 = vadd.f32 %v330, %v342
    %v354 = vadd.f32 %v331, %v342
    %v355 = vadd.f32 %v332, %v342
    %v356 = vadd.f32 %v333, %v342
    %v357 = vadd.f32 %v334, %v342
    %v358 = vadd.f32 %v335, %v342
    %v359 = vadd.f32 %v336, %v342
    %360 = vst [vmem:[%s3] sm:$0xff] %v344
    %361 = vst [vmem:[%s3 + $0x8] sm:$0xff] %v345
    %362 = vst [vmem:[%s3 + $0x10] sm:$0xff] %v346
    %363 = vst [vmem:[%s3 + $0x18] sm:$0xff] %v347
    %364 = vst [vmem:[%s3 + $0x20] sm:$0xff] %v348
    %365 = vst [vmem:[%s3 + $0x28] sm:$0xff] %v349
    %366 = vst [vmem:[%s3 + $0x30] sm:$0xff] %v350
    %367 = vst [vmem:[%s3 + $0x38] sm:$0xff] %v351
    %368 = vst [vmem:[%s3 + $0x40] sm:$0xff] %v352
    %369 = vst [vmem:[%s3 + $0x48] sm:$0xff] %v353
    %370 = vst [vmem:[%s3 + $0x50] sm:$0xff] %v354
    %371 = vst [vmem:[%s3 + $0x58] sm:$0xff] %v355
    %372 = vst [vmem:[%s3 + $0x60] sm:$0xff] %v356
    %373 = vst [vmem:[%s3 + $0x68] sm:$0xff] %v357
    %374 = vst [vmem:[%s3 + $0x70] sm:$0xff] %v358
    %375 = vst [vmem:[%s3 + $0x78] sm:$0xff] %v359
    %v376 = vlaneseq
    %v377 = vshrl.u32 %v376, 7
    %v378 = vadd.s32 %v377, 8
    %v379 = vadd.s32 %v377, 16
    %v380 = vadd.s32 %v377, 24
    %v381 = vadd.s32 %v377, 32
    %v382 = vadd.s32 %v377, 40
    %v383 = vadd.s32 %v377, 48
    %v384 = vadd.s32 %v377, 56
    %v385 = vadd.s32 %v377, 64
    %v386 = vadd.s32 %v377, 72
    %v387 = vadd.s32 %v377, 80
    %v388 = vadd.s32 %v377, 88
    %v389 = vadd.s32 %v377, 96
    %v390 = vadd.s32 %v377, 104
    %v391 = vadd.s32 %v377, 112
    %v392 = vadd.s32 %v377, 120
    %s393 = smul.u32 0, 128
    %v394 = vstv %s393
    %v395 = vadd.s32 %v377, %v394
    %v396 = vadd.s32 %v378, %v394
    %v397 = vadd.s32 %v379, %v394
    %v398 = vadd.s32 %v380, %v394
    %v399 = vadd.s32 %v381, %v394
    %v400 = vadd.s32 %v382, %v394
    %v401 = vadd.s32 %v383, %v394
    %v402 = vadd.s32 %v384, %v394
    %v403 = vadd.s32 %v385, %v394
    %v404 = vadd.s32 %v386, %v394
    %v405 = vadd.s32 %v387, %v394
    %v406 = vadd.s32 %v388, %v394
    %v407 = vadd.s32 %v389, %v394
    %v408 = vadd.s32 %v390, %v394
    %v409 = vadd.s32 %v391, %v394
    %v410 = vadd.s32 %v392, %v394
    %vm411 = vcmp.lt.s32.totalorder %v395, 16
    %vm412 = vcmp.lt.s32.totalorder %v396, 16
    %vm413 = vcmp.lt.s32.totalorder %v397, 16
    %vm414 = vcmp.lt.s32.totalorder %v398, 16
    %vm415 = vcmp.lt.s32.totalorder %v399, 16
    %vm416 = vcmp.lt.s32.totalorder %v400, 16
    %vm417 = vcmp.lt.s32.totalorder %v401, 16
    %vm418 = vcmp.lt.s32.totalorder %v402, 16
    %vm419 = vcmp.lt.s32.totalorder %v403, 16
    %vm420 = vcmp.lt.s32.totalorder %v404, 16
    %vm421 = vcmp.lt.s32.totalorder %v405, 16
    %vm422 = vcmp.lt.s32.totalorder %v406, 16
    %vm423 = vcmp.lt.s32.totalorder %v407, 16
    %vm424 = vcmp.lt.s32.totalorder %v408, 16
    %vm425 = vcmp.lt.s32.totalorder %v409, 16
    %vm426 = vcmp.lt.s32.totalorder %v410, 16
    %v427 = vsel %vm411, %v344, 0.0
    %v428 = vsel %vm412, %v345, 0.0
    %v429 = vsel %vm413, %v346, 0.0
    %v430 = vsel %vm414, %v347, 0.0
    %v431 = vsel %vm415, %v348, 0.0
    %v432 = vsel %vm416, %v349, 0.0
    %v433 = vsel %vm417, %v350, 0.0
    %v434 = vsel %vm418, %v351, 0.0
    %v435 = vsel %vm419, %v352, 0.0
    %v436 = vsel %vm420, %v353, 0.0
    %v437 = vsel %vm421, %v354, 0.0
    %v438 = vsel %vm422, %v355, 0.0
    %v439 = vsel %vm423, %v356, 0.0
    %v440 = vsel %vm424, %v357, 0.0
    %v441 = vsel %vm425, %v358, 0.0
    %v442 = vsel %vm426, %v359, 0.0
    %v443 = vld [vmem:[%s4] sm:$0x1]
    %v444 = vadd.f32 %v427, %v428
    %v445 = vadd.f32 %v444, %v429
    %v446 = vadd.f32 %v445, %v430
    %v447 = vadd.f32 %v446, %v431
    %v448 = vadd.f32 %v447, %v432
    %v449 = vadd.f32 %v448, %v433
    %v450 = vadd.f32 %v449, %v434
    %v451 = vadd.f32 %v450, %v435
    %v452 = vadd.f32 %v451, %v436
    %v453 = vadd.f32 %v452, %v437
    %v454 = vadd.f32 %v453, %v438
    %v455 = vadd.f32 %v454, %v439
    %v456 = vadd.f32 %v455, %v440
    %v457 = vadd.f32 %v456, %v441
    %v458 = vadd.f32 %v457, %v442
    %v459 = vrot.slane %v458, 4
    %v460 = vadd.f32 %v458, %v459
    %v461 = vrot.slane %v460, 2
    %v462 = vadd.f32 %v460, %v461
    %v463 = vrot.slane %v462, 1
    %v464 = vadd.f32 %v462, %v463
    %v465 = vadd.f32 %v443, %v464
    %466 = vst [vmem:[%s4] sm:$0x1] %v465
    %v467 = vld [vmem:[%s5] sm:$0x1]
    %v468 = vmul.f32 %v427, %v427
    %v469 = vmul.f32 %v428, %v428
    %v470 = vmul.f32 %v429, %v429
    %v471 = vmul.f32 %v430, %v430
    %v472 = vmul.f32 %v431, %v431
    %v473 = vmul.f32 %v432, %v432
    %v474 = vmul.f32 %v433, %v433
    %v475 = vmul.f32 %v434, %v434
    %v476 = vmul.f32 %v435, %v435
    %v477 = vmul.f32 %v436, %v436
    %v478 = vmul.f32 %v437, %v437
    %v479 = vmul.f32 %v438, %v438
    %v480 = vmul.f32 %v439, %v439
    %v481 = vmul.f32 %v440, %v440
    %v482 = vmul.f32 %v441, %v441
    %v483 = vmul.f32 %v442, %v442
    %v484 = vadd.f32 %v468, %v469
    %v485 = vadd.f32 %v484, %v470
    %v486 = vadd.f32 %v485, %v471
    %v487 = vadd.f32 %v486, %v472
    %v488 = vadd.f32 %v487, %v473
    %v489 = vadd.f32 %v488, %v474
    %v490 = vadd.f32 %v489, %v475
    %v491 = vadd.f32 %v490, %v476
    %v492 = vadd.f32 %v491, %v477
    %v493 = vadd.f32 %v492, %v478
    %v494 = vadd.f32 %v493, %v479
    %v495 = vadd.f32 %v494, %v480
    %v496 = vadd.f32 %v495, %v481
    %v497 = vadd.f32 %v496, %v482
    %v498 = vadd.f32 %v497, %v483
    %v499 = vrot.slane %v498, 4
    %v500 = vadd.f32 %v498, %v499
    %v501 = vrot.slane %v500, 2
    %v502 = vadd.f32 %v500, %v501
    %v503 = vrot.slane %v502, 1
    %v504 = vadd.f32 %v502, %v503
    %v505 = vadd.f32 %v467, %v504
    %506 = vst [vmem:[%s5] sm:$0x1] %v505
  $region25: #{gcn_forward.8} parent=0 // pred_fallthru
    _
  // Predicated region
  $region26: #{gcn_forward.8} parent=0 // pred_check
    _
  $region27: #{gcn_forward.8} parent=0 // pred_check_branch
    %508 = sbr.rel (%p20) target = $region29
  $region28: #{gcn_forward.8} parent=0 // pred_region
    %v509 = vld [vmem:[%s4] sm:$0x1]
    %v510 = vmul.f32 %v509, 0.0625
    %v511 = vld [vmem:[%s5] sm:$0x1]
    %v512 = vmul.f32 %v511, 0.0625
    %v513 = vmul.f32 %v510, %v510
    %v514 = vsub.f32 %v512, %v513
    %v515 = vmax.f32 %v514, 0.0
    %516 = vst [vmem:[%s4] sm:$0x1] %v510
    %v517 = vadd.f32 %v515, 1e-05
    %v518 = vrsqrt.pop %v517
    %519 = vst [vmem:[%s5] sm:$0x1] %v518
  $region29: #{gcn_forward.8} parent=0 // pred_fallthru
    _
  // Predicated region
  $region30: #{gcn_forward.8} parent=0 // pred_check
    _
  $region31: #{gcn_forward.8} parent=0 // pred_check_branch
    %521 = sbr.rel (0) target = $region33
  $region32: #{gcn_forward.8} parent=0 // pred_region
    _
  $region33: #{gcn_forward.8} parent=0 // pred_fallthru
    _
  // Predicated region
  $region34: #{gcn_forward.8} parent=0 // pred_check
    _
  $region35: #{gcn_forward.8} parent=0 // pred_check_branch
    %523 = sbr.rel (0) target = $region37
  $region36: #{gcn_forward.8} parent=0 // pred_region
    _
  $region37: #{gcn_forward.8} parent=0 // pred_fallthru
    _
  // Predicated region
  $region38: #{gcn_forward.8} parent=0 // pred_check
    _
  $region39: #{gcn_forward.8} parent=0 // pred_check_branch
    %525 = sbr.rel (0) target = $region41
  $region40: #{gcn_forward.8} parent=0 // pred_region
    _
  $region41: #{gcn_forward.8} parent=0 // pred_fallthru
    _
  // Predicated region
  $region42: #{gcn_forward.8} parent=0 // pred_check
    _
  $region43: #{gcn_forward.8} parent=0 // pred_check_branch
    %527 = sbr.rel (0) target = $region45
  $region44: #{gcn_forward.8} parent=0 // pred_region
    _
  $region45: #{gcn_forward.8} parent=0 // pred_fallthru
    _
  // Predicated region
  $region46: #{gcn_forward.8} parent=0 // pred_check
    _
  $region47: #{gcn_forward.8} parent=0 // pred_check_branch
    %529 = sbr.rel (0) target = $region49
  $region48: #{gcn_forward.8} parent=0 // pred_region
    _
  $region49: #{gcn_forward.8} parent=0 // pred_fallthru
    _
  // Predicated region
  $region50: #{gcn_forward.8} parent=0 // pred_check
    _
  $region51: #{gcn_forward.8} parent=0 // pred_check_branch
    %531 = sbr.rel (0) target = $region53
  $region52: #{gcn_forward.8} parent=0 // pred_region
    _
  $region53: #{gcn_forward.8} parent=0 // pred_fallthru
    _

// kernel: gcn_forward.12
$region0: #{gcn_forward.12}
  #allocation0 [shape = 'u32[]', space=smem, size = 0x4, offset = 0x4, fixed_abs, tag = 'smem constant byte address 0x4 - core index']
  #allocation1 [shape = 'u32[144,128]{1,0:T(1,128)}', space=vmem, size = 0x12000, scoped, tag = 'internal scratch']
  %s0 = inlined_call_operand.vmem [shape: f32[128,128], index: 0, kind: input, shape index: {}]
  %s1 = inlined_call_operand.vmem [shape: f32[1,128], index: 1, kind: input, shape index: {}]
  %s2 = inlined_call_operand.vmem [shape: f32[1,128], index: 2, kind: input, shape index: {}]
  %s3 = inlined_call_operand.vmem [shape: f32[1,128], index: 3, kind: input, shape index: {}]
  %s4 = inlined_call_operand.vmem [shape: f32[1,128], index: 4, kind: input, shape index: {}]
  %s5 = inlined_call_operand.vmem [shape: f32[128,128], index: 5, kind: input, shape index: {}, may-alias: {5,7}]
  %s6 = inlined_call_operand.hbm [shape: f32[128,128], index: 6, kind: output, shape index: {0}]
  %s7 = inlined_call_operand.vmem [shape: f32[128,128], index: 7, kind: output, shape index: {1}, may-alias: {5,7}]
  %8 = xla_tuple %s6, %s7
  %s9 = sld [smem:[#allocation0]]
  $region42: #{gcn_forward.12} parent=0
    _
  %s11 = ssub.s32 1, %s9
  %s12 = scalar_select 0, %s11, %s9
  $region1: #{gcn_forward.12} parent=0
    #allocation2 [shape = 'u8[65536]{0}', space=vmem, size = 0x10000, scoped, tag = 'output window, operand 0, single buffered']
    #allocation3 [shape = 's32[1]{0}', space=sflag, size = 0x4, scoped, tag = 'scoped memory for gcn_forward.12']
    %13 = vsyncpa [#allocation3], 0
    // Predicated region
    $region2: #{gcn_forward.12} parent=1 // pred_check
      _
    $region3: #{gcn_forward.12} parent=1 // pred_check_branch
      %15 = sbr.rel (0) target = $region5
    $region4: #{gcn_forward.12} parent=1 // pred_region
      _
    $region5: #{gcn_forward.12} parent=1 // pred_fallthru
      _
    // Predicated region
    $region6: #{gcn_forward.12} parent=1 // pred_check
      _
    $region7: #{gcn_forward.12} parent=1 // pred_check_branch
      %17 = sbr.rel (0) target = $region9
    $region8: #{gcn_forward.12} parent=1 // pred_region
      _
    $region9: #{gcn_forward.12} parent=1 // pred_fallthru
      _
    // Predicated region
    $region10: #{gcn_forward.12} parent=1 // pred_check
      _
    $region11: #{gcn_forward.12} parent=1 // pred_check_branch
      %19 = sbr.rel (0) target = $region13
    $region12: #{gcn_forward.12} parent=1 // pred_region
      _
    $region13: #{gcn_forward.12} parent=1 // pred_fallthru
      _
    // Predicated region
    $region14: #{gcn_forward.12} parent=1 // pred_check
      _
    $region15: #{gcn_forward.12} parent=1 // pred_check_branch
      %21 = sbr.rel (0) target = $region17
    $region16: #{gcn_forward.12} parent=1 // pred_region
      _
    $region17: #{gcn_forward.12} parent=1 // pred_fallthru
      _
    // Predicated region
    $region18: #{gcn_forward.12} parent=1 // pred_check
      _
    $region19: #{gcn_forward.12} parent=1 // pred_check_branch
      %23 = sbr.rel (0) target = $region21
    $region20: #{gcn_forward.12} parent=1 // pred_region
      _
    $region21: #{gcn_forward.12} parent=1 // pred_fallthru
      _
    // Predicated region
    $region22: #{gcn_forward.12} parent=1 // pred_check
      _
    $region23: #{gcn_forward.12} parent=1 // pred_check_branch
      %25 = sbr.rel (0) target = $region25
    $region24: #{gcn_forward.12} parent=1 // pred_region
      _
    $region25: #{gcn_forward.12} parent=1 // pred_fallthru
      _
    %v26 = vld [vmem:[%s0] sm:$0xff]
    %v27 = vld [vmem:[%s0 + $0x8] sm:$0xff]
    %v28 = vld [vmem:[%s0 + $0x10] sm:$0xff]
    %v29 = vld [vmem:[%s0 + $0x18] sm:$0xff]
    %v30 = vld [vmem:[%s0 + $0x20] sm:$0xff]
    %v31 = vld [vmem:[%s0 + $0x28] sm:$0xff]
    %v32 = vld [vmem:[%s0 + $0x30] sm:$0xff]
    %v33 = vld [vmem:[%s0 + $0x38] sm:$0xff]
    %v34 = vld [vmem:[%s0 + $0x40] sm:$0xff]
    %v35 = vld [vmem:[%s0 + $0x48] sm:$0xff]
    %v36 = vld [vmem:[%s0 + $0x50] sm:$0xff]
    %v37 = vld [vmem:[%s0 + $0x58] sm:$0xff]
    %v38 = vld [vmem:[%s0 + $0x60] sm:$0xff]
    %v39 = vld [vmem:[%s0 + $0x68] sm:$0xff]
    %v40 = vld [vmem:[%s0 + $0x70] sm:$0xff]
    %v41 = vld [vmem:[%s0 + $0x78] sm:$0xff]
    %v42 = vld [vmem:[%s1] sm:$0x1]
    %v44 = vlaneseq
    %v45 = vshrl.u32 %v44, 7
    %v46 = vsub.s32 0, %v45
    %v47 = vrot.slane %v42, %v46
    %v49 = vsub.f32 %v26, %v47
    %v50 = vsub.f32 %v27, %v47
    %v51 = vsub.f32 %v28, %v47
    %v52 = vsub.f32 %v29, %v47
    %v53 = vsub.f32 %v30, %v47
    %v54 = vsub.f32 %v31, %v47
    %v55 = vsub.f32 %v32, %v47
    %v56 = vsub.f32 %v33, %v47
    %v57 = vsub.f32 %v34, %v47
    %v58 = vsub.f32 %v35, %v47
    %v59 = vsub.f32 %v36, %v47
    %v60 = vsub.f32 %v37, %v47
    %v61 = vsub.f32 %v38, %v47
    %v62 = vsub.f32 %v39, %v47
    %v63 = vsub.f32 %v40, %v47
    %v64 = vsub.f32 %v41, %v47
    %v65 = vld [vmem:[%s2] sm:$0x1]
    %v67 = vlaneseq
    %v68 = vshrl.u32 %v67, 7
    %v69 = vsub.s32 0, %v68
    %v70 = vrot.slane %v65, %v69
    %v72 = vmul.f32 %v49, %v70
    %v73 = vmul.f32 %v50, %v70
    %v74 = vmul.f32 %v51, %v70
    %v75 = vmul.f32 %v52, %v70
    %v76 = vmul.f32 %v53, %v70
    %v77 = vmul.f32 %v54, %v70
    %v78 = vmul.f32 %v55, %v70
    %v79 = vmul.f32 %v56, %v70
    %v80 = vmul.f32 %v57, %v70
    %v81 = vmul.f32 %v58, %v70
    %v82 = vmul.f32 %v59, %v70
    %v83 = vmul.f32 %v60, %v70
    %v84 = vmul.f32 %v61, %v70
    %v85 = vmul.f32 %v62, %v70
    %v86 = vmul.f32 %v63, %v70
    %v87 = vmul.f32 %v64, %v70
    %v88 = vld [vmem:[%s3] sm:$0x1]
    %v90 = vlaneseq
    %v91 = vshrl.u32 %v90, 7
    %v92 = vsub.s32 0, %v91
    %v93 = vrot.slane %v88, %v92
    %v95 = vmul.f32 %v72, %v93
    %v96 = vmul.f32 %v73, %v93
    %v97 = vmul.f32 %v74, %v93
    %v98 = vmul.f32 %v75, %v93
    %v99 = vmul.f32 %v76, %v93
    %v100 = vmul.f32 %v77, %v93
    %v101 = vmul.f32 %v78, %v93
    %v102 = vmul.f32 %v79, %v93
    %v103 = vmul.f32 %v80, %v93
    %v104 = vmul.f32 %v81, %v93
    %v105 = vmul.f32 %v82, %v93
    %v106 = vmul.f32 %v83, %v93
    %v107 = vmul.f32 %v84, %v93
    %v108 = vmul.f32 %v85, %v93
    %v109 = vmul.f32 %v86, %v93
    %v110 = vmul.f32 %v87, %v93
    %v111 = vld [vmem:[%s4] sm:$0x1]
    %v113 = vlaneseq
    %v114 = vshrl.u32 %v113, 7
    %v115 = vsub.s32 0, %v114
    %v116 = vrot.slane %v111, %v115
    %v118 = vadd.f32 %v95, %v116
    %v119 = vadd.f32 %v96, %v116
    %v120 = vadd.f32 %v97, %v116
    %v121 = vadd.f32 %v98, %v116
    %v122 = vadd.f32 %v99, %v116
    %v123 = vadd.f32 %v100, %v116
    %v124 = vadd.f32 %v101, %v116
    %v125 = vadd.f32 %v102, %v116
    %v126 = vadd.f32 %v103, %v116
    %v127 = vadd.f32 %v104, %v116
    %v128 = vadd.f32 %v105, %v116
    %v129 = vadd.f32 %v106, %v116
    %v130 = vadd.f32 %v107, %v116
    %v131 = vadd.f32 %v108, %v116
    %v132 = vadd.f32 %v109, %v116
    %v133 = vadd.f32 %v110, %v116
    %v134 = vmax.f32 %v118, 0.0
    %v135 = vmax.f32 %v119, 0.0
    %v136 = vmax.f32 %v120, 0.0
    %v137 = vmax.f32 %v121, 0.0
    %v138 = vmax.f32 %v122, 0.0
    %v139 = vmax.f32 %v123, 0.0
    %v140 = vmax.f32 %v124, 0.0
    %v141 = vmax.f32 %v125, 0.0
    %v142 = vmax.f32 %v126, 0.0
    %v143 = vmax.f32 %v127, 0.0
    %v144 = vmax.f32 %v128, 0.0
    %v145 = vmax.f32 %v129, 0.0
    %v146 = vmax.f32 %v130, 0.0
    %v147 = vmax.f32 %v131, 0.0
    %v148 = vmax.f32 %v132, 0.0
    %v149 = vmax.f32 %v133, 0.0
    %150 = vst [vmem:[#allocation2] sm:$0xff] %v134
    %151 = vst [vmem:[#allocation2 + $0x8] sm:$0xff] %v135
    %152 = vst [vmem:[#allocation2 + $0x10] sm:$0xff] %v136
    %153 = vst [vmem:[#allocation2 + $0x18] sm:$0xff] %v137
    %154 = vst [vmem:[#allocation2 + $0x20] sm:$0xff] %v138
    %155 = vst [vmem:[#allocation2 + $0x28] sm:$0xff] %v139
    %156 = vst [vmem:[#allocation2 + $0x30] sm:$0xff] %v140
    %157 = vst [vmem:[#allocation2 + $0x38] sm:$0xff] %v141
    %158 = vst [vmem:[#allocation2 + $0x40] sm:$0xff] %v142
    %159 = vst [vmem:[#allocation2 + $0x48] sm:$0xff] %v143
    %160 = vst [vmem:[#allocation2 + $0x50] sm:$0xff] %v144
    %161 = vst [vmem:[#allocation2 + $0x58] sm:$0xff] %v145
    %162 = vst [vmem:[#allocation2 + $0x60] sm:$0xff] %v146
    %163 = vst [vmem:[#allocation2 + $0x68] sm:$0xff] %v147
    %164 = vst [vmem:[#allocation2 + $0x70] sm:$0xff] %v148
    %165 = vst [vmem:[#allocation2 + $0x78] sm:$0xff] %v149
    %v166 = vld [vmem:[%s5] sm:$0xff]
    %v167 = vld [vmem:[%s5 + $0x8] sm:$0xff]
    %v168 = vld [vmem:[%s5 + $0x10] sm:$0xff]
    %v169 = vld [vmem:[%s5 + $0x18] sm:$0xff]
    %v170 = vld [vmem:[%s5 + $0x20] sm:$0xff]
    %v171 = vld [vmem:[%s5 + $0x28] sm:$0xff]
    %v172 = vld [vmem:[%s5 + $0x30] sm:$0xff]
    %v173 = vld [vmem:[%s5 + $0x38] sm:$0xff]
    %v174 = vld [vmem:[%s5 + $0x40] sm:$0xff]
    %v175 = vld [vmem:[%s5 + $0x48] sm:$0xff]
    %v176 = vld [vmem:[%s5 + $0x50] sm:$0xff]
    %v177 = vld [vmem:[%s5 + $0x58] sm:$0xff]
    %v178 = vld [vmem:[%s5 + $0x60] sm:$0xff]
    %v179 = vld [vmem:[%s5 + $0x68] sm:$0xff]
    %v180 = vld [vmem:[%s5 + $0x70] sm:$0xff]
    %v181 = vld [vmem:[%s5 + $0x78] sm:$0xff]
    %v182 = vadd.f32 %v166, %v134
    %v183 = vadd.f32 %v167, %v135
    %v184 = vadd.f32 %v168, %v136
    %v185 = vadd.f32 %v169, %v137
    %v186 = vadd.f32 %v170, %v138
    %v187 = vadd.f32 %v171, %v139
    %v188 = vadd.f32 %v172, %v140
    %v189 = vadd.f32 %v173, %v141
    %v190 = vadd.f32 %v174, %v142
    %v191 = vadd.f32 %v175, %v143
    %v192 = vadd.f32 %v176, %v144
    %v193 = vadd.f32 %v177, %v145
    %v194 = vadd.f32 %v178, %v146
    %v195 = vadd.f32 %v179, %v147
    %v196 = vadd.f32 %v180, %v148
    %v197 = vadd.f32 %v181, %v149
    %198 = vst [vmem:[%s7] sm:$0xff] %v182
    %199 = vst [vmem:[%s7 + $0x8] sm:$0xff] %v183
    %200 = vst [vmem:[%s7 + $0x10] sm:$0xff] %v184
    %201 = vst [vmem:[%s7 + $0x18] sm:$0xff] %v185
    %202 = vst [vmem:[%s7 + $0x20] sm:$0xff] %v186
    %203 = vst [vmem:[%s7 + $0x28] sm:$0xff] %v187
    %204 = vst [vmem:[%s7 + $0x30] sm:$0xff] %v188
    %205 = vst [vmem:[%s7 + $0x38] sm:$0xff] %v189
    %206 = vst [vmem:[%s7 + $0x40] sm:$0xff] %v190
    %207 = vst [vmem:[%s7 + $0x48] sm:$0xff] %v191
    %208 = vst [vmem:[%s7 + $0x50] sm:$0xff] %v192
    %209 = vst [vmem:[%s7 + $0x58] sm:$0xff] %v193
    %210 = vst [vmem:[%s7 + $0x60] sm:$0xff] %v194
    %211 = vst [vmem:[%s7 + $0x68] sm:$0xff] %v195
    %212 = vst [vmem:[%s7 + $0x70] sm:$0xff] %v196
    %213 = vst [vmem:[%s7 + $0x78] sm:$0xff] %v197
    // Predicated region
    $region26: #{gcn_forward.12} parent=1 // pred_check
      _
    $region27: #{gcn_forward.12} parent=1 // pred_check_branch
      %215 = sbr.rel (0) target = $region29
    $region28: #{gcn_forward.12} parent=1 // pred_region
      %s217 = ssub.s32 2048, 2048
      %218 = vsyncadd [#allocation3], %s217
      %s219 = sshll.u32 [#allocation2], 4
      %s220 = int_to_ptr.vmem [resolvable:$true] %s219
      %225 = dma.vmem_to_hbm [thread:$0]  %s220, 2048, %s6, [#allocation3], 128, 128, 8
    $region29: #{gcn_forward.12} parent=1 // pred_fallthru
      _
    // Predicated region
    $region30: #{gcn_forward.12} parent=1 // pred_check
      _
    $region31: #{gcn_forward.12} parent=1 // pred_check_branch
      %227 = sbr.rel (0) target = $region33
    $region32: #{gcn_forward.12} parent=1 // pred_region
      _
    $region33: #{gcn_forward.12} parent=1 // pred_fallthru
      _
    // Predicated region
    $region34: #{gcn_forward.12} parent=1 // pred_check
      _
    $region35: #{gcn_forward.12} parent=1 // pred_check_branch
      %229 = sbr.rel (0) target = $region37
    $region36: #{gcn_forward.12} parent=1 // pred_region
      %230 = dma.done [#allocation3], 2048
    $region37: #{gcn_forward.12} parent=1 // pred_fallthru
      _
    // Predicated region
    $region38: #{gcn_forward.12} parent=1 // pred_check
      _
    $region39: #{gcn_forward.12} parent=1 // pred_check_branch
      %232 = sbr.rel (0) target = $region41
    $region40: #{gcn_forward.12} parent=1 // pred_region
      _
    $region41: #{gcn_forward.12} parent=1 // pred_fallthru
      _
    %233 = vsyncpa [#allocation3], 1

// kernel: gcn_forward.13
$region0: #{gcn_forward.13}
  #allocation0 [shape = 'u32[]', space=smem, size = 0x4, offset = 0x4, fixed_abs, tag = 'smem constant byte address 0x4 - core index']
  #allocation1 [shape = 'u32[144,128]{1,0:T(1,128)}', space=vmem, size = 0x12000, scoped, tag = 'internal scratch']
  #allocation2 [shape = 'f32[8,128]{1,0:T(8,128)}', space=vmem, size = 0x1000, scoped, tag = 'scratch operand']
  #allocation3 [shape = 'f32[8,128]{1,0:T(8,128)}', space=vmem, size = 0x1000, scoped, tag = 'scratch operand']
  #allocation4 [shape = 's32[1]{0}', space=sflag, size = 0x4, scoped, tag = 'scoped memory for gcn_forward.13']
  #allocation5 [shape = 'u8[512]{0}', space=smem, size = 0x200, scoped, tag = 'prefetched SMEM operand 0']
  #allocation6 [shape = 'u8[512]{0}', space=smem, size = 0x200, scoped, tag = 'prefetched SMEM operand 1']
  %s0 = inlined_call_operand.vmem [shape: s32[16], index: 0, kind: input, shape index: {}]
  %s1 = inlined_call_operand.vmem [shape: s32[16], index: 1, kind: input, shape index: {}]
  %s2 = inlined_call_operand.vmem [shape: f32[128,128], index: 2, kind: input, shape index: {}]
  %s3 = inlined_call_operand.vmem [shape: f32[128,128], index: 3, kind: input, shape index: {}]
  %s4 = inlined_call_operand.vmem [shape: f32[128,128], index: 4, kind: input, shape index: {}]
  %s5 = inlined_call_operand.vmem [shape: f32[1,128], index: 5, kind: input, shape index: {}]
  %s6 = inlined_call_operand.hbm [shape: f32[16,128], index: 6, kind: output, shape index: {}]
  %s7 = sld [smem:[#allocation0]]
  $region49: #{gcn_forward.13} parent=0
    _
  %s9 = ssub.s32 1, %s7
  %s10 = scalar_select 0, %s9, %s7
  %s11 = sshll.u32 %s0, 4
  %s12 = int_to_ptr.vmem [resolvable:$true] %s11
  %14 = dma.vmem_to_smem %s12, 16, [#allocation5], [#allocation4]
  %s15 = sshll.u32 %s1, 4
  %s16 = int_to_ptr.vmem [resolvable:$true] %s15
  %18 = dma.vmem_to_smem %s16, 16, [#allocation6], [#allocation4]
  %19 = dma.done [#allocation4], 32
  %20 = sfence
  $region1: #{gcn_forward.13} parent=0
    #allocation7 [shape = 'u8[8192]{0}', space=vmem, size = 0x2000, scoped, tag = 'output window, operand 0']
    #allocation8 [shape = 's32[2]{0}', space=sflag, size = 0x8, scoped, tag = 'scoped memory for gcn_forward.13']
    %21 = vsyncpa [#allocation8], 0
    %s22 = scalar_lea.sflag [#allocation8], 1
    %23 = vsyncpa %s22, 0
    loop: start=0, step=1, limit=4
    $region2: #{gcn_forward.13} parent=1 // loop_pre_header
      _
    $region3: #{gcn_forward.13} parent=1 // loop_header
      %s25 = sphi 0, %s29
      %p26 = scmp.ge.s32.totalorder %s25, 4
      %s33 = sphi 0, %s33
      %s35 = sphi 0, %s33
      %s36 = sphi 0, %s35
      %s50 = sphi 0, %s36
      %s54 = sphi 0, %s54
      %s56 = sphi 0, %s54
      %s57 = sphi 0, %s56
      %s71 = sphi 0, %s57
      %s75 = sphi 0, %s75
      %s77 = sphi 0, %s75
      %s78 = sphi 0, %s77
      %s92 = sphi 0, %s78
      %s96 = sphi 0, %s96
      %s98 = sphi 0, %s96
      %s99 = sphi 0, %s98
      %s113 = sphi 0, %s99
      %s119 = sphi 0, %s121
      %s122 = sphi 0, %s119
      %s123 = sphi 0, %s122
      %s139 = sphi 0, %s123
    $region4: #{gcn_forward.13} parent=1 // loop_header_branch
      %28 = sbr.rel (%p26) target = $region8
    $region5: #{gcn_forward.13} parent=1 // loop_body
      %s30 = ssub.s32 %s25, 1
      %s31 = ssub.s32 %s25, 2
      %s32 = sadd.s32 %s25, 1
      %s34 = sadd.s32 %s33, 1
      %p37 = scmp.eq.s32.totalorder %s25, 1
      %p38 = scmp.ne.s32.totalorder %s33, %s35
      %p39 = scmp.eq.s32.totalorder %s25, 0
      %p40 = por %p38, %p39
      %p41 = scmp.ne.s32.totalorder %s33, %s35
      %p42 = scmp.eq.s32.totalorder %s30, 1
      %p43 = por %p41, %p42
      %p44 = scmp.ne.s32.totalorder %s35, %s36
      %p45 = scmp.eq.s32.totalorder %s30, 0
      %p46 = por %p44, %p45
      %p47 = scmp.ne.s32.totalorder %s35, %s36
      %p48 = scmp.eq.s32.totalorder %s31, 1
      %p49 = por %p47, %p48
      %p51 = scmp.ne.s32.totalorder %s36, %s50
      %p52 = scmp.eq.s32.totalorder %s31, 0
      %p53 = por %p51, %p52
      %s55 = sadd.s32 %s54, 1
      %p58 = scmp.eq.s32.totalorder %s25, 1
      %p59 = scmp.ne.s32.totalorder %s54, %s56
      %p60 = scmp.eq.s32.totalorder %s25, 0
      %p61 = por %p59, %p60
      %p62 = scmp.ne.s32.totalorder %s54, %s56
      %p63 = scmp.eq.s32.totalorder %s30, 1
      %p64 = por %p62, %p63
      %p65 = scmp.ne.s32.totalorder %s56, %s57
      %p66 = scmp.eq.s32.totalorder %s30, 0
      %p67 = por %p65, %p66
      %p68 = scmp.ne.s32.totalorder %s56, %s57
      %p69 = scmp.eq.s32.totalorder %s31, 1
      %p70 = por %p68, %p69
      %p72 = scmp.ne.s32.totalorder %s57, %s71
      %p73 = scmp.eq.s32.totalorder %s31, 0
      %p74 = por %p72, %p73
      %s76 = sadd.s32 %s75, 1
      %p79 = scmp.eq.s32.totalorder %s25, 1
      %p80 = scmp.ne.s32.totalorder %s75, %s77
      %p81 = scmp.eq.s32.totalorder %s25, 0
      %p82 = por %p80, %p81
      %p83 = scmp.ne.s32.totalorder %s75, %s77
      %p84 = scmp.eq.s32.totalorder %s30, 1
      %p85 = por %p83, %p84
      %p86 = scmp.ne.s32.totalorder %s77, %s78
      %p87 = scmp.eq.s32.totalorder %s30, 0
      %p88 = por %p86, %p87
      %p89 = scmp.ne.s32.totalorder %s77, %s78
      %p90 = scmp.eq.s32.totalorder %s31, 1
      %p91 = por %p89, %p90
      %p93 = scmp.ne.s32.totalorder %s78, %s92
      %p94 = scmp.eq.s32.totalorder %s31, 0
      %p95 = por %p93, %p94
      %s97 = sadd.s32 %s96, 1
      %p100 = scmp.eq.s32.totalorder %s25, 1
      %p101 = scmp.ne.s32.totalorder %s96, %s98
      %p102 = scmp.eq.s32.totalorder %s25, 0
      %p103 = por %p101, %p102
      %p104 = scmp.ne.s32.totalorder %s96, %s98
      %p105 = scmp.eq.s32.totalorder %s30, 1
      %p106 = por %p104, %p105
      %p107 = scmp.ne.s32.totalorder %s98, %s99
      %p108 = scmp.eq.s32.totalorder %s30, 0
      %p109 = por %p107, %p108
      %p110 = scmp.ne.s32.totalorder %s98, %s99
      %p111 = scmp.eq.s32.totalorder %s31, 1
      %p112 = por %p110, %p111
      %p114 = scmp.ne.s32.totalorder %s99, %s113
      %p115 = scmp.eq.s32.totalorder %s31, 0
      %p116 = por %p114, %p115
      %s117 = ssub.s32 %s25, %s32
      %p118 = scmp.eq.s32.totalorder %s117, 0
      %s120 = sadd.s32 %s119, 1
      %s121 = scalar_select %p118, %s119, %s120
      %p124 = pneg %p118
      %p125 = scmp.eq.s32.totalorder %s25, 1
      %p126 = por %p124, %p125
      %p127 = scmp.ne.s32.totalorder %s119, %s122
      %p128 = scmp.eq.s32.totalorder %s25, 0
      %p129 = por %p127, %p128
      %p130 = scmp.ne.s32.totalorder %s119, %s122
      %p131 = scmp.eq.s32.totalorder %s30, 1
      %p132 = por %p130, %p131
      %p133 = scmp.ne.s32.totalorder %s122, %s123
      %p134 = scmp.eq.s32.totalorder %s30, 0
      %p135 = por %p133, %p134
      %p136 = scmp.ne.s32.totalorder %s122, %s123
      %p137 = scmp.eq.s32.totalorder %s31, 1
      %p138 = por %p136, %p137
      %p140 = scmp.ne.s32.totalorder %s123, %s139
      %p141 = scmp.eq.s32.totalorder %s31, 0
      %p142 = por %p140, %p141
      %p143 = scmp.le.s32.totalorder 1, %s25
      %p144 = scmp.lt.s32.totalorder %s25, 3
      %p145 = pnand %p143, %p144
      %p146 = pneg %p145
      // Predicated region
      $region9: #{gcn_forward.13} parent=5 // pred_check
        _
      $region10: #{gcn_forward.13} parent=5 // pred_check_branch
        %148 = sbr.rel (%p145) target = $region12
      $region11: #{gcn_forward.13} parent=5 // pred_region
        %s149 = ssub.s32 %s25, 1
        // Predicated region
        $region13: #{gcn_forward.13} parent=11 // pred_check
          %p150 = pneg %p46
        $region14: #{gcn_forward.13} parent=11 // pred_check_branch
          %152 = sbr.rel (%p150) target = $region16
        $region15: #{gcn_forward.13} parent=11 // pred_region
          _
        $region16: #{gcn_forward.13} parent=11 // pred_fallthru
          _
        // Predicated region
        $region17: #{gcn_forward.13} parent=11 // pred_check
          %p153 = pneg %p67
        $region18: #{gcn_forward.13} parent=11 // pred_check_branch
          %155 = sbr.rel (%p153) target = $region20
        $region19: #{gcn_forward.13} parent=11 // pred_region
          _
        $region20: #{gcn_forward.13} parent=11 // pred_fallthru
          _
        // Predicated region
        $region21: #{gcn_forward.13} parent=11 // pred_check
          %p156 = pneg %p88
        $region22: #{gcn_forward.13} parent=11 // pred_check_branch
          %158 = sbr.rel (%p156) target = $region24
        $region23: #{gcn_forward.13} parent=11 // pred_region
          _
        $region24: #{gcn_forward.13} parent=11 // pred_fallthru
          _
        // Predicated region
        $region25: #{gcn_forward.13} parent=11 // pred_check
          %p159 = pneg %p109
        $region26: #{gcn_forward.13} parent=11 // pred_check_branch
          %161 = sbr.rel (%p159) target = $region28
        $region27: #{gcn_forward.13} parent=11 // pred_region
          _
        $region28: #{gcn_forward.13} parent=11 // pred_fallthru
          _
      $region12: #{gcn_forward.13} parent=5 // pred_fallthru
        _
      %p162 = scmp.lt.s32.totalorder %s25, 2
      // Predicated region
      $region29: #{gcn_forward.13} parent=5 // pred_check
        %p163 = pneg %p162
      $region30: #{gcn_forward.13} parent=5 // pred_check_branch
        %165 = sbr.rel (%p163) target = $region32
      $region31: #{gcn_forward.13} parent=5 // pred_region
        _
      $region32: #{gcn_forward.13} parent=5 // pred_fallthru
        _
      %p166 = scmp.le.s32.totalorder 1, %s25
      %p167 = scmp.lt.s32.totalorder %s25, 3
      %p168 = pnand %p166, %p167
      %p169 = pneg %p168
      // Predicated region
      $region33: #{gcn_forward.13} parent=5 // pred_check
        _
      $region34: #{gcn_forward.13} parent=5 // pred_check_branch
        %171 = sbr.rel (%p168) target = $region36
      $region35: #{gcn_forward.13} parent=5 // pred_region
        %s172 = ssub.s32 %s25, 1
        %p173 = pneg %p46
        %p174 = pneg %p43
        %p175 = pneg %p67
        %p176 = pneg %p64
        %p177 = pneg %p88
        %p178 = pneg %p85
        %p179 = pneg %p109
        %p180 = pneg %p106
        %p181 = pneg %p135
        %p182 = pneg %p132
        %s183 = sand.u32 %s122, 1
        %s184 = scalar_lea.sflag [#allocation8], %s183
        %s185 = sand.u32 %s122, 1
        %s186 = smul.addr %s185, 8
        %s187 = scalar_lea.vmem [#allocation7], %s186
        %s188 = smul.u32 %s30, 8
        %s189 = sld [smem:[#allocation5 + %s188]]
        %s190 = scalar_lea.vmem %s2, %s189
        %v191 = vld [vmem:[%s190] sm:$0x1]
        %192 = vst [vmem:[#allocation2] sm:$0x1] %v191
        %s193 = sld [smem:[#allocation6 + %s188]]
        %s194 = scalar_lea.vmem %s2, %s193
        %v195 = vld [vmem:[%s194] sm:$0x1]
        %196 = vst [vmem:[#allocation3] sm:$0x1] %v195
        %s197 = sadd.s32 %s188, 1
        %s198 = sld [smem:[#allocation5 + %s197]]
        %s199 = scalar_lea.vmem %s2, %s198
        %v200 = vld [vmem:[%s199] sm:$0x1]
        %201 = vst [vmem:[#allocation2 + $0x1] sm:$0x1] %v200
        %s202 = sld [smem:[#allocation6 + %s197]]
        %s203 = scalar_lea.vmem %s2, %s202
        %v204 = vld [vmem:[%s203] sm:$0x1]
        %205 = vst [vmem:[#allocation3 + $0x1] sm:$0x1] %v204
        %s206 = sadd.s32 %s188, 2
        %s207 = sld [smem:[#allocation5 + %s206]]
        %s208 = scalar_lea.vmem %s2, %s207
        %v209 = vld [vmem:[%s208] sm:$0x1]
        %210 = vst [vmem:[#allocation2 + $0x2] sm:$0x1] %v209
        %s211 = sld [smem:[#allocation6 + %s206]]
        %s212 = scalar_lea.vmem %s2, %s211
        %v213 = vld [vmem:[%s212] sm:$0x1]
        %214 = vst [vmem:[#allocation3 + $0x2] sm:$0x1] %v213
        %s215 = sadd.s32 %s188, 3
        %s216 = sld [smem:[#allocation5 + %s215]]
        %s217 = scalar_lea.vmem %s2, %s216
        %v218 = vld [vmem:[%s217] sm:$0x1]
        %219 = vst [vmem:[#allocation2 + $0x3] sm:$0x1] %v218
        %s220 = sld [smem:[#allocation6 + %s215]]
        %s221 = scalar_lea.vmem %s2, %s220
        %v222 = vld [vmem:[%s221] sm:$0x1]
        %223 = vst [vmem:[#allocation3 + $0x3] sm:$0x1] %v222
        %s224 = sadd.s32 %s188, 4
        %s225 = sld [smem:[#allocation5 + %s224]]
        %s226 = scalar_lea.vmem %s2, %s225
        %v227 = vld [vmem:[%s226] sm:$0x1]
        %228 = vst [vmem:[#allocation2 + $0x4] sm:$0x1] %v227
        %s229 = sld [smem:[#allocation6 + %s224]]
        %s230 = scalar_lea.vmem %s2, %s229
        %v231 = vld [vmem:[%s230] sm:$0x1]
        %232 = vst [vmem:[#allocation3 + $0x4] sm:$0x1] %v231
        %s233 = sadd.s32 %s188, 5
        %s234 = sld [smem:[#allocation5 + %s233]]
        %s235 = scalar_lea.vmem %s2, %s234
        %v236 = vld [vmem:[%s235] sm:$0x1]
        %237 = vst [vmem:[#allocation2 + $0x5] sm:$0x1] %v236
        %s238 = sld [smem:[#allocation6 + %s233]]
        %s239 = scalar_lea.vmem %s2, %s238
        %v240 = vld [vmem:[%s239] sm:$0x1]
        %241 = vst [vmem:[#allocation3 + $0x5] sm:$0x1] %v240
        %s242 = sadd.s32 %s188, 6
        %s243 = sld [smem:[#allocation5 + %s242]]
        %s244 = scalar_lea.vmem %s2, %s243
        %v245 = vld [vmem:[%s244] sm:$0x1]
        %246 = vst [vmem:[#allocation2 + $0x6] sm:$0x1] %v245
        %s247 = sld [smem:[#allocation6 + %s242]]
        %s248 = scalar_lea.vmem %s2, %s247
        %v249 = vld [vmem:[%s248] sm:$0x1]
        %250 = vst [vmem:[#allocation3 + $0x6] sm:$0x1] %v249
        %s251 = sadd.s32 %s188, 7
        %s252 = sld [smem:[#allocation5 + %s251]]
        %s253 = scalar_lea.vmem %s2, %s252
        %v254 = vld [vmem:[%s253] sm:$0x1]
        %255 = vst [vmem:[#allocation2 + $0x7] sm:$0x1] %v254
        %s256 = sld [smem:[#allocation6 + %s251]]
        %s257 = scalar_lea.vmem %s2, %s256
        %v258 = vld [vmem:[%s257] sm:$0x1]
        %259 = vst [vmem:[#allocation3 + $0x7] sm:$0x1] %v258
        %v260 = vld [vmem:[#allocation2] sm:$0xff]
        %v261 = vld [vmem:[%s3] sm:$0xff]
        %v262 = vld [vmem:[%s3 + $0x8] sm:$0xff]
        %v263 = vld [vmem:[%s3 + $0x10] sm:$0xff]
        %v264 = vld [vmem:[%s3 + $0x18] sm:$0xff]
        %v265 = vld [vmem:[%s3 + $0x20] sm:$0xff]
        %v266 = vld [vmem:[%s3 + $0x28] sm:$0xff]
        %v267 = vld [vmem:[%s3 + $0x30] sm:$0xff]
        %v268 = vld [vmem:[%s3 + $0x38] sm:$0xff]
        %v269 = vld [vmem:[%s3 + $0x40] sm:$0xff]
        %v270 = vld [vmem:[%s3 + $0x48] sm:$0xff]
        %v271 = vld [vmem:[%s3 + $0x50] sm:$0xff]
        %v272 = vld [vmem:[%s3 + $0x58] sm:$0xff]
        %v273 = vld [vmem:[%s3 + $0x60] sm:$0xff]
        %v274 = vld [vmem:[%s3 + $0x68] sm:$0xff]
        %v275 = vld [vmem:[%s3 + $0x70] sm:$0xff]
        %v276 = vld [vmem:[%s3 + $0x78] sm:$0xff]
        %v277 = vld [vmem:[#allocation3] sm:$0xff]
        %v278 = vld [vmem:[%s4] sm:$0xff]
        %v279 = vld [vmem:[%s4 + $0x8] sm:$0xff]
        %v280 = vld [vmem:[%s4 + $0x10] sm:$0xff]
        %v281 = vld [vmem:[%s4 + $0x18] sm:$0xff]
        %v282 = vld [vmem:[%s4 + $0x20] sm:$0xff]
        %v283 = vld [vmem:[%s4 + $0x28] sm:$0xff]
        %v284 = vld [vmem:[%s4 + $0x30] sm:$0xff]
        %v285 = vld [vmem:[%s4 + $0x38] sm:$0xff]
        %v286 = vld [vmem:[%s4 + $0x40] sm:$0xff]
        %v287 = vld [vmem:[%s4 + $0x48] sm:$0xff]
        %v288 = vld [vmem:[%s4 + $0x50] sm:$0xff]
        %v289 = vld [vmem:[%s4 + $0x58] sm:$0xff]
        %v290 = vld [vmem:[%s4 + $0x60] sm:$0xff]
        %v291 = vld [vmem:[%s4 + $0x68] sm:$0xff]
        %v292 = vld [vmem:[%s4 + $0x70] sm:$0xff]
        %v293 = vld [vmem:[%s4 + $0x78] sm:$0xff]
        %294 = vmatprep.subr.mxu0 0.0
        %295 = vmatpush1.msra.mxu0 %v278
        %296 = vmatprep.subr.mxu0 0.0
        %297 = vmatpush1.msra.mxu0 %v279
        %298 = vmatprep.subr.mxu0 0.0
        %299 = vmatpush1.msra.mxu0 %v280
        %300 = vmatprep.subr.mxu0 0.0
        %301 = vmatpush1.msra.mxu0 %v281
        %302 = vmatprep.subr.mxu0 0.0
        %303 = vmatpush1.msra.mxu0 %v282
        %304 = vmatprep.subr.mxu0 0.0
        %305 = vmatpush1.msra.mxu0 %v283
        %306 = vmatprep.subr.mxu0 0.0
        %307 = vmatpush1.msra.mxu0 %v284
        %308 = vmatprep.subr.mxu0 0.0
        %309 = vmatpush1.msra.mxu0 %v285
        %310 = vmatprep.subr.mxu0 0.0
        %311 = vmatpush1.msra.mxu0 %v286
        %312 = vmatprep.subr.mxu0 0.0
        %313 = vmatpush1.msra.mxu0 %v287
        %314 = vmatprep.subr.mxu0 0.0
        %315 = vmatpush1.msra.mxu0 %v288
        %316 = vmatprep.subr.mxu0 0.0
        %317 = vmatpush1.msra.mxu0 %v289
        %318 = vmatprep.subr.mxu0 0.0
        %319 = vmatpush1.msra.mxu0 %v290
        %320 = vmatprep.subr.mxu0 0.0
        %321 = vmatpush1.msra.mxu0 %v291
        %322 = vmatprep.subr.mxu0 0.0
        %323 = vmatpush1.msra.mxu0 %v292
        %324 = vmatprep.subr.mxu0 0.0
        %325 = vmatpush1.msra.mxu0 %v293
        %326 = vmatprep.subr.mxu0 0.0
        %327 = vmatpush1.msra.mxu0 0.0
        %328 = vmatprep.subr.mxu0 0.0
        %329 = vmatpush1.msra.mxu0 0.0
        %330 = vmatprep.subr.mxu0 0.0
        %331 = vmatpush1.msra.mxu0 0.0
        %332 = vmatprep.subr.mxu0 0.0
        %333 = vmatpush1.msra.mxu0 0.0
        %334 = vmatprep.subr.mxu0 0.0
        %335 = vmatpush1.msra.mxu0 0.0
        %336 = vmatprep.subr.mxu0 0.0
        %337 = vmatpush1.msra.mxu0 0.0
        %338 = vmatprep.subr.mxu0 0.0
        %339 = vmatpush1.msra.mxu0 0.0
        %340 = vmatprep.subr.mxu0 0.0
        %341 = vmatpush1.msra.mxu0 0.0
        %342 = vmatprep.subr.mxu0 0.0
        %343 = vmatpush1.msra.mxu0 0.0
        %344 = vmatprep.subr.mxu0 0.0
        %345 = vmatpush1.msra.mxu0 0.0
        %346 = vmatprep.subr.mxu0 0.0
        %347 = vmatpush1.msra.mxu0 0.0
        %348 = vmatprep.subr.mxu0 0.0
        %349 = vmatpush1.msra.mxu0 0.0
        %350 = vmatprep.subr.mxu0 0.0
        %351 = vmatpush1.msra.mxu0 0.0
        %352 = vmatprep.subr.mxu0 0.0
        %353 = vmatpush1.msra.mxu0 0.0
        %354 = vmatprep.subr.mxu0 0.0
        %355 = vmatpush1.msra.mxu0 0.0
        %356 = vmatprep.subr.mxu0 0.0
        %357 = vmatpush1.msra.mxu0 0.0
        %358 = vmatprep.mubr.f32.mxu0 0.0
        %359 = vmatmul.mubr.f32.gmra.mrb[0].mxu0 %v277
        %v360 = vpop.f32.mrb[0].mxu0
        %v361 = vadd.f32 0.0, %v360
        %v362 = vpop.f32.mrb[0].mxu0
        %363 = vdwg.mxu0
        %364 = vmatprep.subr.mxu0 0.0
        %365 = vmatpush1.msra.mxu0 %v261
        %366 = vmatprep.subr.mxu0 0.0
        %367 = vmatpush1.msra.mxu0 %v262
        %368 = vmatprep.subr.mxu0 0.0
        %369 = vmatpush1.msra.mxu0 %v263
        %370 = vmatprep.subr.mxu0 0.0
        %371 = vmatpush1.msra.mxu0 %v264
        %372 = vmatprep.subr.mxu0 0.0
        %373 = vmatpush1.msra.mxu0 %v265
        %374 = vmatprep.subr.mxu0 0.0
        %375 = vmatpush1.msra.mxu0 %v266
        %376 = vmatprep.subr.mxu0 0.0
        %377 = vmatpush1.msra.mxu0 %v267
        %378 = vmatprep.subr.mxu0 0.0
        %379 = vmatpush1.msra.mxu0 %v268
        %380 = vmatprep.subr.mxu0 0.0
        %381 = vmatpush1.msra.mxu0 %v269
        %382 = vmatprep.subr.mxu0 0.0
        %383 = vmatpush1.msra.mxu0 %v270
        %384 = vmatprep.subr.mxu0 0.0
        %385 = vmatpush1.msra.mxu0 %v271
        %386 = vmatprep.subr.mxu0 0.0
        %387 = vmatpush1.msra.mxu0 %v272
        %388 = vmatprep.subr.mxu0 0.0
        %389 = vmatpush1.msra.mxu0 %v273
        %390 = vmatprep.subr.mxu0 0.0
        %391 = vmatpush1.msra.mxu0 %v274
        %392 = vmatprep.subr.mxu0 0.0
        %393 = vmatpush1.msra.mxu0 %v275
        %394 = vmatprep.subr.mxu0 0.0
        %395 = vmatpush1.msra.mxu0 %v276
        %396 = vmatprep.subr.mxu0 0.0
        %397 = vmatpush1.msra.mxu0 0.0
        %398 = vmatprep.subr.mxu0 0.0
        %399 = vmatpush1.msra.mxu0 0.0
        %400 = vmatprep.subr.mxu0 0.0
        %401 = vmatpush1.msra.mxu0 0.0
        %402 = vmatprep.subr.mxu0 0.0
        %403 = vmatpush1.msra.mxu0 0.0
        %404 = vmatprep.subr.mxu0 0.0
        %405 = vmatpush1.msra.mxu0 0.0
        %406 = vmatprep.subr.mxu0 0.0
        %407 = vmatpush1.msra.mxu0 0.0
        %408 = vmatprep.subr.mxu0 0.0
        %409 = vmatpush1.msra.mxu0 0.0
        %410 = vmatprep.subr.mxu0 0.0
        %411 = vmatpush1.msra.mxu0 0.0
        %412 = vmatprep.subr.mxu0 0.0
        %413 = vmatpush1.msra.mxu0 0.0
        %414 = vmatprep.subr.mxu0 0.0
        %415 = vmatpush1.msra.mxu0 0.0
        %416 = vmatprep.subr.mxu0 0.0
        %417 = vmatpush1.msra.mxu0 0.0
        %418 = vmatprep.subr.mxu0 0.0
        %419 = vmatpush1.msra.mxu0 0.0
        %420 = vmatprep.subr.mxu0 0.0
        %421 = vmatpush1.msra.mxu0 0.0
        %422 = vmatprep.subr.mxu0 0.0
        %423 = vmatpush1.msra.mxu0 0.0
        %424 = vmatprep.subr.mxu0 0.0
        %425 = vmatpush1.msra.mxu0 0.0
        %426 = vmatprep.subr.mxu0 0.0
        %427 = vmatpush1.msra.mxu0 0.0
        %428 = vmatprep.mubr.f32.mxu0 0.0
        %429 = vmatmul.mubr.f32.gmra.mrb[0].mxu0 %v260
        %v430 = vpop.f32.mrb[0].mxu0
        %v431 = vadd.f32 %v361, %v430
        %v432 = vpop.f32.mrb[0].mxu0
        %433 = vdwg.mxu0
        %v434 = vld [vmem:[%s5] sm:$0x1]
        %v436 = vlaneseq
        %v437 = vshrl.u32 %v436, 7
        %v438 = vsub.s32 0, %v437
        %v439 = vrot.slane %v434, %v438
        %v441 = vadd.f32 %v431, %v439
        %442 = vst [vmem:[%s187] sm:$0xff] %v441
        %s443 = sand.u32 %s122, 1
        %s444 = scalar_lea.sflag [#allocation8], %s443
        %s445 = sand.u32 %s122, 1
        %s446 = smul.addr %s445, 8
        %s447 = scalar_lea.vmem [#allocation7], %s446
        // Predicated region
        $region37: #{gcn_forward.13} parent=35 // pred_check
          %p448 = pneg %p132
        $region38: #{gcn_forward.13} parent=35 // pred_check_branch
          %450 = sbr.rel (%p448) target = $region40
        $region39: #{gcn_forward.13} parent=35 // pred_region
          %s452 = ssub.s32 128, 128
          %453 = vsyncadd %s444, %s452
          %s454 = smul.addr %s30, 128
          %s455 = scalar_lea.hbm %s6, %s454
          %s457 = sshll.u32 %s447, 4
          %s458 = int_to_ptr.vmem [resolvable:$true] %s457
          %460 = dma.vmem_to_hbm [thread:$0]  %s458, 128, %s455, %s444
        $region40: #{gcn_forward.13} parent=35 // pred_fallthru
          _
      $region36: #{gcn_forward.13} parent=5 // pred_fallthru
        _
      %p461 = scmp.le.s32.totalorder 2, %s25
      // Predicated region
      $region41: #{gcn_forward.13} parent=5 // pred_check
        %p462 = pneg %p461
      $region42: #{gcn_forward.13} parent=5 // pred_check_branch
        %464 = sbr.rel (%p462) target = $region44
      $region43: #{gcn_forward.13} parent=5 // pred_region
        %s465 = ssub.s32 %s25, 2
        // Predicated region
        $region45: #{gcn_forward.13} parent=43 // pred_check
          %p466 = pneg %p138
        $region46: #{gcn_forward.13} parent=43 // pred_check_branch
          %468 = sbr.rel (%p466) target = $region48
        $region47: #{gcn_forward.13} parent=43 // pred_region
          %s469 = sand.u32 %s123, 1
          %s470 = scalar_lea.sflag [#allocation8], %s469
          %s471 = sand.u32 %s123, 1
          %s472 = smul.addr %s471, 8
          %s473 = scalar_lea.vmem [#allocation7], %s472
          %474 = dma.done %s470, 128
        $region48: #{gcn_forward.13} parent=43 // pred_fallthru
          _
      $region44: #{gcn_forward.13} parent=5 // pred_fallthru
        _
    $region6: #{gcn_forward.13} parent=1 // loop_footer
      %s29 = sadd.s32 1, %s25
    $region7: #{gcn_forward.13} parent=1 // loop_footer_branch
      %24 = sbr.rel target = $region3
    $region8: #{gcn_forward.13} parent=1 // loop_exit
      _
    %475 = vsyncpa [#allocation8], 1
    %s476 = scalar_lea.sflag [#allocation8], 1
    %477 = vsyncpa %s476, 1

</llo_original>
